<compile_context>
chip_gen: v5e
topology: v5e:2x2
jax: 0.10.0
libtpu: 0.0.40
codegen_flags: <defaults>
</compile_context>

<pallas_src>
import functools

import jax
import jax.numpy as jnp
from jax.experimental import pallas as pl
from jax.experimental.pallas import tpu as pltpu


# ----------------------------- kernel helpers -----------------------------

def _seq_boundary_masks(rows, period):
    """(rows,1) boolean columns marking the first / last row of each length-`period`
    sequence inside a flat (rows, C) activation.  Computed once per conv stage."""
    assert rows % period == 0, "flattened rows must be a whole number of sequences"
    t = jax.lax.broadcasted_iota(jnp.int32, (rows, 1), 0) % period
    return t == 0, t == period - 1


def _shift_rows(x, shift, zero_mask):
    """Shift rows (time axis) of a flat (R, C) activation by `shift`, zeroing rows that
    would cross a per-sequence boundary (mask precomputed by _seq_boundary_masks).

    shift=+1 -> row r holds x[r-1];  shift=-1 -> row r holds x[r+1].
    """
    rows = x.shape[0]
    rolled = pltpu.roll(x, shift % rows, axis=0)        # XLU sublane rotate
    return jnp.where(zero_mask, 0.0, rolled)


def _maxpool2_rows(y, rows_out):
    """MaxPool1d(kernel=2, stride=2) over the row (time) axis of a flat (R, C) array."""
    c = y.shape[-1]
    y = y.reshape(rows_out, 2, c)
    return jnp.maximum(y[:, 0, :], y[:, 1, :])


def _lstm_cell(gates, c, H):
    """LSTM cell update with gate columns pre-permuted to [i, f, o, g] (wrapper-side),
    so sigmoid only runs over the first 3H lanes."""
    sig = jax.nn.sigmoid(gates[:, :3 * H])
    i = sig[:, 0 * H:1 * H]
    f = sig[:, 1 * H:2 * H]
    o = sig[:, 2 * H:3 * H]
    g = jnp.tanh(gates[:, 3 * H:4 * H])
    c_new = f * c + i * g
    h_new = o * jnp.tanh(c_new)
    return h_new, c_new


# ----------------------------- fused Pallas kernel -----------------------------

def cnn_lstm_kernel(x_ref, w1_ref, b1_ref, w2_ref, b2_ref,
                    wih0_ref, whh0_ref, b0_ref,
                    wl1_ref, bl1_ref,
                    wfc_ref, bfc_ref, out_ref, *, B, L, H):
    f32 = jnp.float32
    bf16 = jnp.bfloat16
    L1 = L // 2
    T = L1 // 2

    # boundary masks (one narrow iota per conv stage, reused by both shifts)
    first1, last1 = _seq_boundary_masks(B * L, L)
    first2, last2 = _seq_boundary_masks(B * L1, L1)

    # ---- conv1 (Cin=1, k=3, pad=1) + ReLU + MaxPool(2,2) ----------------------
    # Cin == 1: per-tap broadcast multiply (pure VPU, f32) + time shifts of the products:
    # y[t] = w0*x[t-1] + w1*x[t] + w2*x[t+1] + b.
    x = x_ref[...]                                   # (B*L, 1)
    # TODO(synk): for large L keep x lane-dense (B, L) instead of (B*L, 1).
    w1 = w1_ref[...]                                 # (3, 64)
    z0 = x * w1[0:1, :]                              # tap 0 -> pairs with x[t-1]
    z1 = x * w1[1:2, :]                              # tap 1 -> x[t]
    z2 = x * w1[2:3, :]                              # tap 2 -> x[t+1]
    y1 = _shift_rows(z0, 1, first1) + z1 + _shift_rows(z2, -1, last1) + b1_ref[...]
    y1 = jnp.maximum(y1, 0.0)                        # ReLU
    a1 = _maxpool2_rows(y1, B * L1)                  # (B*L1, 64) f32

    # ---- conv2 (64 -> 128, k=3, pad=1) + ReLU + MaxPool(2,2) ------------------
    # Per-tap accumulated bf16 dots (no lane concat / no half-empty K-pass on v5e).
    a1m = _shift_rows(a1, 1, first2)                 # x[t-1]
    a1p = _shift_rows(a1, -1, last2)                 # x[t+1]
    y2 = jnp.dot(a1m.astype(bf16), w2_ref[0], preferred_element_type=f32)
    y2 = y2 + jnp.dot(a1.astype(bf16), w2_ref[1], preferred_element_type=f32)
    y2 = y2 + jnp.dot(a1p.astype(bf16), w2_ref[2], preferred_element_type=f32)
    y2 = jnp.maximum(y2 + b2_ref[...], 0.0)
    a2 = _maxpool2_rows(y2, B * T)                   # (B*T, 128) f32, rows b*T + t

    # ---- 2-layer LSTM, pipelined per step --------------------------------------
    # Layer-0 input-to-hidden projection hoisted out of the recurrence (one matmul).
    gx0 = (jnp.dot(a2.astype(bf16), wih0_ref[...], preferred_element_type=f32)
           + b0_ref[...]).reshape(B, T, 4 * H)

    whh0 = whh0_ref[...]                             # (H, 4H)  bf16
    wl1 = wl1_ref[...]                               # (2H, 4H) bf16  ([w_ih_l1; w_hh_l1])
    bl1 = bl1_ref[...]                               # (1, 4H)  f32

    h0 = jnp.zeros((B, H), f32)
    c0 = jnp.zeros((B, H), f32)
    h1 = jnp.zeros((B, H), f32)
    c1 = jnp.zeros((B, H), f32)
    for t in range(T):   # T is tiny & static -> unrolled; use lax.fori_loop if T grows
        # layer 0, step t
        g0 = gx0[:, t, :] + jnp.dot(h0.astype(bf16), whh0, preferred_element_type=f32)
        h0, c0 = _lstm_cell(g0, c0, H)
        # layer 1, step t: one (B,2H)@(2H,4H) push on [h0_t | h1_{t-1}]
        hin = jnp.concatenate([h0, h1], axis=1).astype(bf16)
        g1 = jnp.dot(hin, wl1, preferred_element_type=f32) + bl1
        h1, c1 = _lstm_cell(g1, c1, H)

    # ---- FC on hidden[-1] (lane-dense padded output; sliced outside the kernel) ----
    out_ref[...] = (jnp.dot(h1.astype(bf16), wfc_ref[...], preferred_element_type=f32)
                    + bfc_ref[...])


# ----------------------------- parameter repacking (one-time, outside jit) -----------------------------

def _reorder_gates(w, axis=0):
    """PyTorch gate-block order [i, f, g, o] -> kernel order [i, f, o, g]."""
    i, f, g, o = jnp.split(w, 4, axis=axis)
    return jnp.concatenate([i, f, o, g], axis=axis)


def prepare_params(p):
    """Repack PyTorch-shaped parameters into kernel layout.  Call ONCE at init."""
    bf16 = jnp.bfloat16
    num_classes = p['fc_w'].shape[0]
    out_lanes = max(128, -(-num_classes // 128) * 128)     # lane-dense output width

    # conv1 weight (64, 1, 3) -> tap-major (3, 64); stays f32 (VPU broadcast mul)
    w1 = jnp.transpose(p['conv1_w'][:, 0, :])
    b1 = p['conv1_b'].reshape(1, -1)
    # conv2 weight (128, 64, 3) -> per-tap stack (3, 64, 128), bf16 MXU operands
    w2 = jnp.stack([p['conv2_w'][:, :, k].T for k in range(3)], axis=0).astype(bf16)
    b2 = p['conv2_b'].reshape(1, -1)

    wih0 = _reorder_gates(p['w_ih_l0']).T.astype(bf16)                  # (128, 4H)
    whh0 = _reorder_gates(p['w_hh_l0']).T.astype(bf16)                  # (H, 4H)
    b0 = _reorder_gates(p['b_ih_l0'] + p['b_hh_l0']).reshape(1, -1)

    wl1 = jnp.concatenate([_reorder_gates(p['w_ih_l1']).T,
                           _reorder_gates(p['w_hh_l1']).T],
                          axis=0).astype(bf16)                          # (2H, 4H)
    bl1 = _reorder_gates(p['b_ih_l1'] + p['b_hh_l1']).reshape(1, -1)

    wfc = jnp.pad(p['fc_w'].T, ((0, 0), (0, out_lanes - num_classes))).astype(bf16)
    bfc = jnp.pad(p['fc_b'], (0, out_lanes - num_classes)).reshape(1, -1)

    return dict(w1=w1, b1=b1, w2=w2, b2=b2,
                wih0=wih0, whh0=whh0, b0=b0,
                wl1=wl1, bl1=bl1, wfc=wfc, bfc=bfc)


# ----------------------------- wrapper -----------------------------

def cnn_lstm_forward(x, pp, *, num_classes):
    """x: (B, input_dim) float32, pp: prepare_params() output -> (B, num_classes) f32."""
    B, L = x.shape
    assert L % 4 == 0, "input_dim must be divisible by 4 (two MaxPool1d(2,2) stages)"
    H = pp['whh0'].shape[0]
    out_lanes = pp['wfc'].shape[1]

    args = (
        x.reshape(B * L, 1),
        pp['w1'], pp['b1'], pp['w2'], pp['b2'],
        pp['wih0'], pp['whh0'], pp['b0'],
        pp['wl1'], pp['bl1'],
        pp['wfc'], pp['bfc'],
    )

    vmem = pl.BlockSpec(memory_space=pltpu.MemorySpace.VMEM)
    # NOTE: at this toy size the whole working set is a few KB, so a single grid-less
    # invocation is optimal.  For large B, add a batch-tile grid axis with
    # dimension_semantics=("parallel",) (uses v7x's 2nd TensorCore), size tiles for
    # 64 MiB (v7x) / 128 MiB (v5e/v6e) VMEM, and set vmem_limit_bytes explicitly
    # (v5e's scoped default is only 16 MiB).
    out = pl.pallas_call(
        functools.partial(cnn_lstm_kernel, B=B, L=L, H=H),
        out_shape=jax.ShapeDtypeStruct((B, out_lanes), jnp.float32),
        in_specs=[vmem] * len(args),
        out_specs=vmem,
    )(*args)
    return out[:, :num_classes]


# ----------------------------- pure-JAX reference (validation only) -----------------------------

def reference_forward(x, p):
    B, L = x.shape
    H = p['w_hh_l0'].shape[1]

    def conv1d_same(xc, w, b):          # xc: (B, Cin, L); w: (Cout, Cin, 3); b: (Cout,)
        Lx = xc.shape[-1]
        xp = jnp.pad(xc, ((0, 0), (0, 0), (1, 1)))
        out = sum(jnp.einsum('bcl,dc->bdl', xp[:, :, k:k + Lx], w[:, :, k])
                  for k in range(3))
        return out + b[None, :, None]

    def maxpool2(xc):                   # (B, C, L) -> (B, C, L//2)
        Bc, C, Lx = xc.shape
        return xc.reshape(Bc, C, Lx // 2, 2).max(axis=-1)

    def lstm_layer(xs, w_ih, w_hh, b_ih, b_hh):
        Bx, T, _ = xs.shape
        h = jnp.zeros((Bx, H), jnp.float32)
        c = jnp.zeros((Bx, H), jnp.float32)
        outs = []
        for t in range(T):
            gates = xs[:, t, :] @ w_ih.T + h @ w_hh.T + b_ih + b_hh
            i, f, g, o = jnp.split(gates, 4, axis=1)
            c = jax.nn.sigmoid(f) * c + jax.nn.sigmoid(i) * jnp.tanh(g)
            h = jax.nn.sigmoid(o) * jnp.tanh(c)
            outs.append(h)
        return jnp.stack(outs, axis=1), h

    hc = x[:, None, :]                                                      # (B, 1, L)
    hc = maxpool2(jax.nn.relu(conv1d_same(hc, p['conv1_w'], p['conv1_b'])))
    hc = maxpool2(jax.nn.relu(conv1d_same(hc, p['conv2_w'], p['conv2_b'])))
    seq = jnp.transpose(hc, (0, 2, 1))                                      # (B, T, 128)

    out0, _ = lstm_layer(seq, p['w_ih_l0'], p['w_hh_l0'], p['b_ih_l0'], p['b_hh_l0'])
    _, h_last = lstm_layer(out0, p['w_ih_l1'], p['w_hh_l1'], p['b_ih_l1'], p['b_hh_l1'])
    return h_last @ p['fc_w'].T + p['fc_b']


# ----------------------------- deterministic init -----------------------------

def init_params(key, hidden_dim, num_classes):
    H = hidden_dim
    ks = jax.random.split(key, 16)

    def u(k, shape, scale):
        return jax.random.uniform(k, shape, jnp.float32, -scale, scale)

    return {
        # PyTorch-shaped parameters
        'conv1_w': u(ks[0], (64, 1, 3), 0.5),
        'conv1_b': u(ks[1], (64,), 0.5),
        'conv2_w': u(ks[2], (128, 64, 3), 0.07),
        'conv2_b': u(ks[3], (128,), 0.07),
        'w_ih_l0': u(ks[4], (4 * H, 128), 1.0 / (H ** 0.5)),
        'w_hh_l0': u(ks[5], (4 * H, H), 1.0 / (H ** 0.5)),
        'b_ih_l0': u(ks[6], (4 * H,), 1.0 / (H ** 0.5)),
        'b_hh_l0': u(ks[7], (4 * H,), 1.0 / (H ** 0.5)),
        'w_ih_l1': u(ks[8], (4 * H, H), 1.0 / (H ** 0.5)),
        'w_hh_l1': u(ks[9], (4 * H, H), 1.0 / (H ** 0.5)),
        'b_ih_l1': u(ks[10], (4 * H,), 1.0 / (H ** 0.5)),
        'b_hh_l1': u(ks[11], (4 * H,), 1.0 / (H ** 0.5)),
        'w_ih_l1_': None,  # placeholder removed below
        'fc_w': u(ks[12], (num_classes, H), 1.0 / (H ** 0.5)),
        'fc_b': u(ks[13], (num_classes,), 1.0 / (H ** 0.5)),
    }


# ----------------------------- main -----------------------------

if __name__ == "__main__":
    B, input_dim, hidden_dim, num_classes = 2, 16, 32, 4

    key = jax.random.PRNGKey(0)
    k_x, k_p = jax.random.split(key)
    x = jax.random.normal(k_x, (B, input_dim), jnp.float32)
    params = init_params(k_p, hidden_dim, num_classes)
    params.pop('w_ih_l1_', None)

    # One-time parameter repack (transposes, gate reorder, tap stack, bf16 casts)
    prepped = prepare_params(params)

    fwd = jax.jit(functools.partial(cnn_lstm_forward, num_classes=num_classes))
    out = jax.block_until_ready(fwd(x, prepped))

    assert out.shape == (B, num_classes), out.shape
    assert bool(jnp.all(jnp.isfinite(out)))

    # validate against a pure-JAX f32 reference (tolerance loosened for bf16 MXU operands)
    ref = reference_forward(x, params)
    max_err = float(jnp.max(jnp.abs(out - ref)))
    assert max_err < 1e-1, f"mismatch vs pure-JAX reference: max abs err = {max_err}"

    print("KERNEL_OK")
</pallas_src>

<mosaic_0001>
module attributes {stable_mosaic.version = 11 : i64} {
  func.func @cnn_lstm_kernel(%arg0: memref<32x1xf32, #tpu.memory_space<vmem>>, %arg1: memref<3x64xf32, #tpu.memory_space<vmem>>, %arg2: memref<1x64xf32, #tpu.memory_space<vmem>>, %arg3: memref<3x64x128xbf16, #tpu.memory_space<vmem>>, %arg4: memref<1x128xf32, #tpu.memory_space<vmem>>, %arg5: memref<128x128xbf16, #tpu.memory_space<vmem>>, %arg6: memref<32x128xbf16, #tpu.memory_space<vmem>>, %arg7: memref<1x128xf32, #tpu.memory_space<vmem>>, %arg8: memref<64x128xbf16, #tpu.memory_space<vmem>>, %arg9: memref<1x128xf32, #tpu.memory_space<vmem>>, %arg10: memref<32x128xbf16, #tpu.memory_space<vmem>>, %arg11: memref<1x128xf32, #tpu.memory_space<vmem>>, %arg12: memref<2x128xf32, #tpu.memory_space<vmem>>) attributes {dimension_semantics = [], scalar_prefetch = 0 : i64, scratch_operands = 0 : i64, tpu.core_type = #tpu.core_type<tc>} {
    %0 = tpu.iota {dimensions = array<i32: 0>} : vector<32x1xi32>
    %c16_i32 = arith.constant 16 : i32
    %c0_i32 = arith.constant 0 : i32
    %1 = arith.cmpi eq, %c16_i32, %c0_i32 : i32
    %c1_i32 = arith.constant 1 : i32
    %2 = arith.select %1, %c1_i32, %c16_i32 : i32
    %3 = vector.broadcast %2 : i32 to vector<32x1xi32>
    %4 = arith.remsi %0, %3 : vector<32x1xi32>
    %c0_i32_0 = arith.constant 0 : i32
    %5 = vector.broadcast %c0_i32_0 : i32 to vector<32x1xi32>
    %6 = arith.cmpi ne, %4, %5 : vector<32x1xi32>
    %c0_i32_1 = arith.constant 0 : i32
    %7 = vector.broadcast %c0_i32_1 : i32 to vector<32x1xi32>
    %8 = arith.cmpi slt, %4, %7 : vector<32x1xi32>
    %c0_i32_2 = arith.constant 0 : i32
    %9 = arith.cmpi slt, %2, %c0_i32_2 : i32
    %10 = vector.broadcast %9 : i1 to vector<32x1xi1>
    %11 = vector.broadcast %10 : vector<32x1xi1> to vector<32x1xi1>
    %12 = arith.xori %8, %11 : vector<32x1xi1>
    %13 = arith.andi %12, %6 : vector<32x1xi1>
    %14 = vector.broadcast %2 : i32 to vector<32x1xi32>
    %15 = arith.addi %4, %14 : vector<32x1xi32>
    %16 = arith.select %13, %15, %4 : vector<32x1xi1>, vector<32x1xi32>
    %c0_i32_3 = arith.constant 0 : i32
    %17 = vector.broadcast %c0_i32_3 : i32 to vector<32x1xi32>
    %18 = arith.cmpi eq, %16, %17 : vector<32x1xi32>
    %c15_i32 = arith.constant 15 : i32
    %19 = vector.broadcast %c15_i32 : i32 to vector<32x1xi32>
    %20 = arith.cmpi eq, %16, %19 : vector<32x1xi32>
    %21 = tpu.iota {dimensions = array<i32: 0>} : vector<16x1xi32>
    %c8_i32 = arith.constant 8 : i32
    %c0_i32_4 = arith.constant 0 : i32
    %22 = arith.cmpi eq, %c8_i32, %c0_i32_4 : i32
    %c1_i32_5 = arith.constant 1 : i32
    %23 = arith.select %22, %c1_i32_5, %c8_i32 : i32
    %24 = vector.broadcast %23 : i32 to vector<16x1xi32>
    %25 = arith.remsi %21, %24 : vector<16x1xi32>
    %c0_i32_6 = arith.constant 0 : i32
    %26 = vector.broadcast %c0_i32_6 : i32 to vector<16x1xi32>
    %27 = arith.cmpi ne, %25, %26 : vector<16x1xi32>
    %c0_i32_7 = arith.constant 0 : i32
    %28 = vector.broadcast %c0_i32_7 : i32 to vector<16x1xi32>
    %29 = arith.cmpi slt, %25, %28 : vector<16x1xi32>
    %c0_i32_8 = arith.constant 0 : i32
    %30 = arith.cmpi slt, %23, %c0_i32_8 : i32
    %31 = vector.broadcast %30 : i1 to vector<16x1xi1>
    %32 = vector.broadcast %31 : vector<16x1xi1> to vector<16x1xi1>
    %33 = arith.xori %29, %32 : vector<16x1xi1>
    %34 = arith.andi %33, %27 : vector<16x1xi1>
    %35 = vector.broadcast %23 : i32 to vector<16x1xi32>
    %36 = arith.addi %25, %35 : vector<16x1xi32>
    %37 = arith.select %34, %36, %25 : vector<16x1xi1>, vector<16x1xi32>
    %c0_i32_9 = arith.constant 0 : i32
    %38 = vector.broadcast %c0_i32_9 : i32 to vector<16x1xi32>
    %39 = arith.cmpi eq, %37, %38 : vector<16x1xi32>
    %c7_i32 = arith.constant 7 : i32
    %40 = vector.broadcast %c7_i32 : i32 to vector<16x1xi32>
    %41 = arith.cmpi eq, %37, %40 : vector<16x1xi32>
    %c0 = arith.constant 0 : index
    %c0_10 = arith.constant 0 : index
    %42 = vector.load %arg0[%c0, %c0_10] : memref<32x1xf32, #tpu.memory_space<vmem>>, vector<32x1xf32>
    %c0_11 = arith.constant 0 : index
    %c0_12 = arith.constant 0 : index
    %43 = vector.load %arg1[%c0_11, %c0_12] : memref<3x64xf32, #tpu.memory_space<vmem>>, vector<3x64xf32>
    %44 = vector.extract_strided_slice %43 {offsets = [0, 0], sizes = [1, 64], strides = [1, 1]} : vector<3x64xf32> to vector<1x64xf32>
    %45 = vector.broadcast %42 : vector<32x1xf32> to vector<32x64xf32>
    %46 = vector.broadcast %44 : vector<1x64xf32> to vector<32x64xf32>
    %47 = arith.mulf %45, %46 : vector<32x64xf32>
    %48 = vector.extract_strided_slice %43 {offsets = [1, 0], sizes = [1, 64], strides = [1, 1]} : vector<3x64xf32> to vector<1x64xf32>
    %49 = vector.broadcast %42 : vector<32x1xf32> to vector<32x64xf32>
    %50 = vector.broadcast %48 : vector<1x64xf32> to vector<32x64xf32>
    %51 = arith.mulf %49, %50 : vector<32x64xf32>
    %52 = vector.extract_strided_slice %43 {offsets = [2, 0], sizes = [1, 64], strides = [1, 1]} : vector<3x64xf32> to vector<1x64xf32>
    %53 = vector.broadcast %42 : vector<32x1xf32> to vector<32x64xf32>
    %54 = vector.broadcast %52 : vector<1x64xf32> to vector<32x64xf32>
    %55 = arith.mulf %53, %54 : vector<32x64xf32>
    %c1_i32_13 = arith.constant 1 : i32
    %56 = tpu.dynamic_rotate %47 by %c1_i32_13 dim 0 : vector<32x64xf32>, i32 -> vector<32x64xf32>
    %cst = arith.constant 0.000000e+00 : f32
    %57 = vector.shape_cast %18 : vector<32x1xi1> to vector<32x1xi1>
    %58 = vector.broadcast %57 : vector<32x1xi1> to vector<32x64xi1>
    %59 = vector.broadcast %cst : f32 to vector<32x64xf32>
    %60 = arith.select %58, %59, %56 : vector<32x64xi1>, vector<32x64xf32>
    %61 = arith.addf %60, %51 : vector<32x64xf32>
    %c31_i32 = arith.constant 31 : i32
    %62 = tpu.dynamic_rotate %55 by %c31_i32 dim 0 : vector<32x64xf32>, i32 -> vector<32x64xf32>
    %cst_14 = arith.constant 0.000000e+00 : f32
    %63 = vector.shape_cast %20 : vector<32x1xi1> to vector<32x1xi1>
    %64 = vector.broadcast %63 : vector<32x1xi1> to vector<32x64xi1>
    %65 = vector.broadcast %cst_14 : f32 to vector<32x64xf32>
    %66 = arith.select %64, %65, %62 : vector<32x64xi1>, vector<32x64xf32>
    %67 = arith.addf %61, %66 : vector<32x64xf32>
    %c0_15 = arith.constant 0 : index
    %c0_16 = arith.constant 0 : index
    %68 = vector.load %arg2[%c0_15, %c0_16] : memref<1x64xf32, #tpu.memory_space<vmem>>, vector<1x64xf32>
    %69 = vector.broadcast %68 : vector<1x64xf32> to vector<32x64xf32>
    %70 = arith.addf %67, %69 : vector<32x64xf32>
    %cst_17 = arith.constant 0.000000e+00 : f32
    %71 = vector.broadcast %cst_17 : f32 to vector<32x64xf32>
    %72 = arith.maximumf %70, %71 : vector<32x64xf32>
    %73 = vector.shape_cast %72 : vector<32x64xf32> to vector<16x2x64xf32>
    %74 = vector.extract_strided_slice %73 {offsets = [0, 0, 0], sizes = [16, 1, 64], strides = [1, 1, 1]} : vector<16x2x64xf32> to vector<16x1x64xf32>
    %75 = vector.shape_cast %74 : vector<16x1x64xf32> to vector<16x64xf32>
    %76 = vector.extract_strided_slice %73 {offsets = [0, 1, 0], sizes = [16, 1, 64], strides = [1, 1, 1]} : vector<16x2x64xf32> to vector<16x1x64xf32>
    %77 = vector.shape_cast %76 : vector<16x1x64xf32> to vector<16x64xf32>
    %78 = arith.maximumf %75, %77 : vector<16x64xf32>
    %c1_i32_18 = arith.constant 1 : i32
    %79 = tpu.dynamic_rotate %78 by %c1_i32_18 dim 0 : vector<16x64xf32>, i32 -> vector<16x64xf32>
    %cst_19 = arith.constant 0.000000e+00 : f32
    %80 = vector.shape_cast %39 : vector<16x1xi1> to vector<16x1xi1>
    %81 = vector.broadcast %80 : vector<16x1xi1> to vector<16x64xi1>
    %82 = vector.broadcast %cst_19 : f32 to vector<16x64xf32>
    %83 = arith.select %81, %82, %79 : vector<16x64xi1>, vector<16x64xf32>
    %c15_i32_20 = arith.constant 15 : i32
    %84 = tpu.dynamic_rotate %78 by %c15_i32_20 dim 0 : vector<16x64xf32>, i32 -> vector<16x64xf32>
    %cst_21 = arith.constant 0.000000e+00 : f32
    %85 = vector.shape_cast %41 : vector<16x1xi1> to vector<16x1xi1>
    %86 = vector.broadcast %85 : vector<16x1xi1> to vector<16x64xi1>
    %87 = vector.broadcast %cst_21 : f32 to vector<16x64xf32>
    %88 = arith.select %86, %87, %84 : vector<16x64xi1>, vector<16x64xf32>
    %89 = arith.truncf %83 : vector<16x64xf32> to vector<16x64xbf16>
    %c0_22 = arith.constant 0 : index
    %c0_23 = arith.constant 0 : index
    %c0_24 = arith.constant 0 : index
    %90 = vector.load %arg3[%c0_22, %c0_23, %c0_24] : memref<3x64x128xbf16, #tpu.memory_space<vmem>>, vector<1x64x128xbf16>
    %91 = vector.shape_cast %90 : vector<1x64x128xbf16> to vector<64x128xbf16>
    %cst_25 = arith.constant dense<0.000000e+00> : vector<16x128xf32>
    %92 = tpu.matmul %89, %91, %cst_25 {dimension_numbers = #tpu.dot_dimension_numbers<[1], [0], [0], [1], [0, 0, 1, 1], [], []>} : vector<16x64xbf16>, vector<64x128xbf16>, vector<16x128xf32> -> vector<16x128xf32>
    %93 = arith.truncf %78 : vector<16x64xf32> to vector<16x64xbf16>
    %c1 = arith.constant 1 : index
    %c0_26 = arith.constant 0 : index
    %c0_27 = arith.constant 0 : index
    %94 = vector.load %arg3[%c1, %c0_26, %c0_27] : memref<3x64x128xbf16, #tpu.memory_space<vmem>>, vector<1x64x128xbf16>
    %95 = vector.shape_cast %94 : vector<1x64x128xbf16> to vector<64x128xbf16>
    %cst_28 = arith.constant dense<0.000000e+00> : vector<16x128xf32>
    %96 = tpu.matmul %93, %95, %cst_28 {dimension_numbers = #tpu.dot_dimension_numbers<[1], [0], [0], [1], [0, 0, 1, 1], [], []>} : vector<16x64xbf16>, vector<64x128xbf16>, vector<16x128xf32> -> vector<16x128xf32>
    %97 = arith.addf %92, %96 : vector<16x128xf32>
    %98 = arith.truncf %88 : vector<16x64xf32> to vector<16x64xbf16>
    %c2 = arith.constant 2 : index
    %c0_29 = arith.constant 0 : index
    %c0_30 = arith.constant 0 : index
    %99 = vector.load %arg3[%c2, %c0_29, %c0_30] : memref<3x64x128xbf16, #tpu.memory_space<vmem>>, vector<1x64x128xbf16>
    %100 = vector.shape_cast %99 : vector<1x64x128xbf16> to vector<64x128xbf16>
    %cst_31 = arith.constant dense<0.000000e+00> : vector<16x128xf32>
    %101 = tpu.matmul %98, %100, %cst_31 {dimension_numbers = #tpu.dot_dimension_numbers<[1], [0], [0], [1], [0, 0, 1, 1], [], []>} : vector<16x64xbf16>, vector<64x128xbf16>, vector<16x128xf32> -> vector<16x128xf32>
    %102 = arith.addf %97, %101 : vector<16x128xf32>
    %c0_32 = arith.constant 0 : index
    %c0_33 = arith.constant 0 : index
    %103 = vector.load %arg4[%c0_32, %c0_33] : memref<1x128xf32, #tpu.memory_space<vmem>>, vector<1x128xf32>
    %104 = vector.broadcast %103 : vector<1x128xf32> to vector<16x128xf32>
    %105 = arith.addf %102, %104 : vector<16x128xf32>
    %cst_34 = arith.constant 0.000000e+00 : f32
    %106 = vector.broadcast %cst_34 : f32 to vector<16x128xf32>
    %107 = arith.maximumf %105, %106 : vector<16x128xf32>
    %108 = vector.shape_cast %107 : vector<16x128xf32> to vector<8x2x128xf32>
    %109 = vector.extract_strided_slice %108 {offsets = [0, 0, 0], sizes = [8, 1, 128], strides = [1, 1, 1]} : vector<8x2x128xf32> to vector<8x1x128xf32>
    %110 = vector.shape_cast %109 : vector<8x1x128xf32> to vector<8x128xf32>
    %111 = vector.extract_strided_slice %108 {offsets = [0, 1, 0], sizes = [8, 1, 128], strides = [1, 1, 1]} : vector<8x2x128xf32> to vector<8x1x128xf32>
    %112 = vector.shape_cast %111 : vector<8x1x128xf32> to vector<8x128xf32>
    %113 = arith.maximumf %110, %112 : vector<8x128xf32>
    %114 = arith.truncf %113 : vector<8x128xf32> to vector<8x128xbf16>
    %c0_35 = arith.constant 0 : index
    %c0_36 = arith.constant 0 : index
    %115 = vector.load %arg5[%c0_35, %c0_36] : memref<128x128xbf16, #tpu.memory_space<vmem>>, vector<128x128xbf16>
    %cst_37 = arith.constant dense<0.000000e+00> : vector<8x128xf32>
    %116 = tpu.matmul %114, %115, %cst_37 {dimension_numbers = #tpu.dot_dimension_numbers<[1], [0], [0], [1], [0, 0, 1, 1], [], []>} : vector<8x128xbf16>, vector<128x128xbf16>, vector<8x128xf32> -> vector<8x128xf32>
    %c0_38 = arith.constant 0 : index
    %c0_39 = arith.constant 0 : index
    %117 = vector.load %arg7[%c0_38, %c0_39] : memref<1x128xf32, #tpu.memory_space<vmem>>, vector<1x128xf32>
    %118 = vector.broadcast %117 : vector<1x128xf32> to vector<8x128xf32>
    %119 = arith.addf %116, %118 : vector<8x128xf32>
    %120 = vector.shape_cast %119 : vector<8x128xf32> to vector<2x4x128xf32>
    %c0_40 = arith.constant 0 : index
    %c0_41 = arith.constant 0 : index
    %121 = vector.load %arg6[%c0_40, %c0_41] : memref<32x128xbf16, #tpu.memory_space<vmem>>, vector<32x128xbf16>
    %c0_42 = arith.constant 0 : index
    %c0_43 = arith.constant 0 : index
    %122 = vector.load %arg8[%c0_42, %c0_43] : memref<64x128xbf16, #tpu.memory_space<vmem>>, vector<64x128xbf16>
    %c0_44 = arith.constant 0 : index
    %c0_45 = arith.constant 0 : index
    %123 = vector.load %arg9[%c0_44, %c0_45] : memref<1x128xf32, #tpu.memory_space<vmem>>, vector<1x128xf32>
    %cst_46 = arith.constant 0.000000e+00 : f32
    %124 = vector.broadcast %cst_46 : f32 to vector<2x32xf32>
    %cst_47 = arith.constant 0.000000e+00 : f32
    %125 = vector.broadcast %cst_47 : f32 to vector<2x32xf32>
    %cst_48 = arith.constant 0.000000e+00 : f32
    %126 = vector.broadcast %cst_48 : f32 to vector<2x32xf32>
    %cst_49 = arith.constant 0.000000e+00 : f32
    %127 = vector.broadcast %cst_49 : f32 to vector<2x32xf32>
    %128 = vector.extract_strided_slice %120 {offsets = [0, 0, 0], sizes = [2, 1, 128], strides = [1, 1, 1]} : vector<2x4x128xf32> to vector<2x1x128xf32>
    %129 = vector.shape_cast %128 : vector<2x1x128xf32> to vector<2x128xf32>
    %130 = arith.truncf %124 : vector<2x32xf32> to vector<2x32xbf16>
    %cst_50 = arith.constant dense<0.000000e+00> : vector<2x128xf32>
    %131 = tpu.matmul %130, %121, %cst_50 {dimension_numbers = #tpu.dot_dimension_numbers<[1], [0], [0], [1], [0, 0, 1, 1], [], []>} : vector<2x32xbf16>, vector<32x128xbf16>, vector<2x128xf32> -> vector<2x128xf32>
    %132 = arith.addf %129, %131 : vector<2x128xf32>
    %133 = vector.extract_strided_slice %132 {offsets = [0, 0], sizes = [2, 96], strides = [1, 1]} : vector<2x128xf32> to vector<2x96xf32>
    %134 = arith.negf %133 : vector<2x96xf32>
    %135 = math.exp %134 : vector<2x96xf32>
    %cst_51 = arith.constant 1.000000e+00 : f32
    %136 = vector.broadcast %cst_51 : f32 to vector<2x96xf32>
    %137 = arith.addf %136, %135 : vector<2x96xf32>
    %138 = arith.divf %136, %137 : vector<2x96xf32>
    %139 = vector.extract_strided_slice %138 {offsets = [0, 0], sizes = [2, 32], strides = [1, 1]} : vector<2x96xf32> to vector<2x32xf32>
    %140 = vector.extract_strided_slice %138 {offsets = [0, 32], sizes = [2, 32], strides = [1, 1]} : vector<2x96xf32> to vector<2x32xf32>
    %141 = vector.extract_strided_slice %138 {offsets = [0, 64], sizes = [2, 32], strides = [1, 1]} : vector<2x96xf32> to vector<2x32xf32>
    %142 = vector.extract_strided_slice %132 {offsets = [0, 96], sizes = [2, 32], strides = [1, 1]} : vector<2x128xf32> to vector<2x32xf32>
    %143 = math.tanh %142 : vector<2x32xf32>
    %144 = arith.mulf %140, %125 : vector<2x32xf32>
    %145 = arith.mulf %139, %143 : vector<2x32xf32>
    %146 = arith.addf %144, %145 : vector<2x32xf32>
    %147 = math.tanh %146 : vector<2x32xf32>
    %148 = arith.mulf %141, %147 : vector<2x32xf32>
    %149 = tpu.concatenate %148, %126 in 1 : vector<2x32xf32>, vector<2x32xf32> -> vector<2x64xf32>
    %150 = arith.truncf %149 : vector<2x64xf32> to vector<2x64xbf16>
    %cst_52 = arith.constant dense<0.000000e+00> : vector<2x128xf32>
    %151 = tpu.matmul %150, %122, %cst_52 {dimension_numbers = #tpu.dot_dimension_numbers<[1], [0], [0], [1], [0, 0, 1, 1], [], []>} : vector<2x64xbf16>, vector<64x128xbf16>, vector<2x128xf32> -> vector<2x128xf32>
    %152 = vector.broadcast %123 : vector<1x128xf32> to vector<2x128xf32>
    %153 = arith.addf %151, %152 : vector<2x128xf32>
    %154 = vector.extract_strided_slice %153 {offsets = [0, 0], sizes = [2, 96], strides = [1, 1]} : vector<2x128xf32> to vector<2x96xf32>
    %155 = arith.negf %154 : vector<2x96xf32>
    %156 = math.exp %155 : vector<2x96xf32>
    %cst_53 = arith.constant 1.000000e+00 : f32
    %157 = vector.broadcast %cst_53 : f32 to vector<2x96xf32>
    %158 = arith.addf %157, %156 : vector<2x96xf32>
    %159 = arith.divf %157, %158 : vector<2x96xf32>
    %160 = vector.extract_strided_slice %159 {offsets = [0, 0], sizes = [2, 32], strides = [1, 1]} : vector<2x96xf32> to vector<2x32xf32>
    %161 = vector.extract_strided_slice %159 {offsets = [0, 32], sizes = [2, 32], strides = [1, 1]} : vector<2x96xf32> to vector<2x32xf32>
    %162 = vector.extract_strided_slice %159 {offsets = [0, 64], sizes = [2, 32], strides = [1, 1]} : vector<2x96xf32> to vector<2x32xf32>
    %163 = vector.extract_strided_slice %153 {offsets = [0, 96], sizes = [2, 32], strides = [1, 1]} : vector<2x128xf32> to vector<2x32xf32>
    %164 = math.tanh %163 : vector<2x32xf32>
    %165 = arith.mulf %161, %127 : vector<2x32xf32>
    %166 = arith.mulf %160, %164 : vector<2x32xf32>
    %167 = arith.addf %165, %166 : vector<2x32xf32>
    %168 = math.tanh %167 : vector<2x32xf32>
    %169 = arith.mulf %162, %168 : vector<2x32xf32>
    %170 = vector.extract_strided_slice %120 {offsets = [0, 1, 0], sizes = [2, 1, 128], strides = [1, 1, 1]} : vector<2x4x128xf32> to vector<2x1x128xf32>
    %171 = vector.shape_cast %170 : vector<2x1x128xf32> to vector<2x128xf32>
    %172 = arith.truncf %148 : vector<2x32xf32> to vector<2x32xbf16>
    %cst_54 = arith.constant dense<0.000000e+00> : vector<2x128xf32>
    %173 = tpu.matmul %172, %121, %cst_54 {dimension_numbers = #tpu.dot_dimension_numbers<[1], [0], [0], [1], [0, 0, 1, 1], [], []>} : vector<2x32xbf16>, vector<32x128xbf16>, vector<2x128xf32> -> vector<2x128xf32>
    %174 = arith.addf %171, %173 : vector<2x128xf32>
    %175 = vector.extract_strided_slice %174 {offsets = [0, 0], sizes = [2, 96], strides = [1, 1]} : vector<2x128xf32> to vector<2x96xf32>
    %176 = arith.negf %175 : vector<2x96xf32>
    %177 = math.exp %176 : vector<2x96xf32>
    %cst_55 = arith.constant 1.000000e+00 : f32
    %178 = vector.broadcast %cst_55 : f32 to vector<2x96xf32>
    %179 = arith.addf %178, %177 : vector<2x96xf32>
    %180 = arith.divf %178, %179 : vector<2x96xf32>
    %181 = vector.extract_strided_slice %180 {offsets = [0, 0], sizes = [2, 32], strides = [1, 1]} : vector<2x96xf32> to vector<2x32xf32>
    %182 = vector.extract_strided_slice %180 {offsets = [0, 32], sizes = [2, 32], strides = [1, 1]} : vector<2x96xf32> to vector<2x32xf32>
    %183 = vector.extract_strided_slice %180 {offsets = [0, 64], sizes = [2, 32], strides = [1, 1]} : vector<2x96xf32> to vector<2x32xf32>
    %184 = vector.extract_strided_slice %174 {offsets = [0, 96], sizes = [2, 32], strides = [1, 1]} : vector<2x128xf32> to vector<2x32xf32>
    %185 = math.tanh %184 : vector<2x32xf32>
    %186 = arith.mulf %182, %146 : vector<2x32xf32>
    %187 = arith.mulf %181, %185 : vector<2x32xf32>
    %188 = arith.addf %186, %187 : vector<2x32xf32>
    %189 = math.tanh %188 : vector<2x32xf32>
    %190 = arith.mulf %183, %189 : vector<2x32xf32>
    %191 = tpu.concatenate %190, %169 in 1 : vector<2x32xf32>, vector<2x32xf32> -> vector<2x64xf32>
    %192 = arith.truncf %191 : vector<2x64xf32> to vector<2x64xbf16>
    %cst_56 = arith.constant dense<0.000000e+00> : vector<2x128xf32>
    %193 = tpu.matmul %192, %122, %cst_56 {dimension_numbers = #tpu.dot_dimension_numbers<[1], [0], [0], [1], [0, 0, 1, 1], [], []>} : vector<2x64xbf16>, vector<64x128xbf16>, vector<2x128xf32> -> vector<2x128xf32>
    %194 = vector.broadcast %123 : vector<1x128xf32> to vector<2x128xf32>
    %195 = arith.addf %193, %194 : vector<2x128xf32>
    %196 = vector.extract_strided_slice %195 {offsets = [0, 0], sizes = [2, 96], strides = [1, 1]} : vector<2x128xf32> to vector<2x96xf32>
    %197 = arith.negf %196 : vector<2x96xf32>
    %198 = math.exp %197 : vector<2x96xf32>
    %cst_57 = arith.constant 1.000000e+00 : f32
    %199 = vector.broadcast %cst_57 : f32 to vector<2x96xf32>
    %200 = arith.addf %199, %198 : vector<2x96xf32>
    %201 = arith.divf %199, %200 : vector<2x96xf32>
    %202 = vector.extract_strided_slice %201 {offsets = [0, 0], sizes = [2, 32], strides = [1, 1]} : vector<2x96xf32> to vector<2x32xf32>
    %203 = vector.extract_strided_slice %201 {offsets = [0, 32], sizes = [2, 32], strides = [1, 1]} : vector<2x96xf32> to vector<2x32xf32>
    %204 = vector.extract_strided_slice %201 {offsets = [0, 64], sizes = [2, 32], strides = [1, 1]} : vector<2x96xf32> to vector<2x32xf32>
    %205 = vector.extract_strided_slice %195 {offsets = [0, 96], sizes = [2, 32], strides = [1, 1]} : vector<2x128xf32> to vector<2x32xf32>
    %206 = math.tanh %205 : vector<2x32xf32>
    %207 = arith.mulf %203, %167 : vector<2x32xf32>
    %208 = arith.mulf %202, %206 : vector<2x32xf32>
    %209 = arith.addf %207, %208 : vector<2x32xf32>
    %210 = math.tanh %209 : vector<2x32xf32>
    %211 = arith.mulf %204, %210 : vector<2x32xf32>
    %212 = vector.extract_strided_slice %120 {offsets = [0, 2, 0], sizes = [2, 1, 128], strides = [1, 1, 1]} : vector<2x4x128xf32> to vector<2x1x128xf32>
    %213 = vector.shape_cast %212 : vector<2x1x128xf32> to vector<2x128xf32>
    %214 = arith.truncf %190 : vector<2x32xf32> to vector<2x32xbf16>
    %cst_58 = arith.constant dense<0.000000e+00> : vector<2x128xf32>
    %215 = tpu.matmul %214, %121, %cst_58 {dimension_numbers = #tpu.dot_dimension_numbers<[1], [0], [0], [1], [0, 0, 1, 1], [], []>} : vector<2x32xbf16>, vector<32x128xbf16>, vector<2x128xf32> -> vector<2x128xf32>
    %216 = arith.addf %213, %215 : vector<2x128xf32>
    %217 = vector.extract_strided_slice %216 {offsets = [0, 0], sizes = [2, 96], strides = [1, 1]} : vector<2x128xf32> to vector<2x96xf32>
    %218 = arith.negf %217 : vector<2x96xf32>
    %219 = math.exp %218 : vector<2x96xf32>
    %cst_59 = arith.constant 1.000000e+00 : f32
    %220 = vector.broadcast %cst_59 : f32 to vector<2x96xf32>
    %221 = arith.addf %220, %219 : vector<2x96xf32>
    %222 = arith.divf %220, %221 : vector<2x96xf32>
    %223 = vector.extract_strided_slice %222 {offsets = [0, 0], sizes = [2, 32], strides = [1, 1]} : vector<2x96xf32> to vector<2x32xf32>
    %224 = vector.extract_strided_slice %222 {offsets = [0, 32], sizes = [2, 32], strides = [1, 1]} : vector<2x96xf32> to vector<2x32xf32>
    %225 = vector.extract_strided_slice %222 {offsets = [0, 64], sizes = [2, 32], strides = [1, 1]} : vector<2x96xf32> to vector<2x32xf32>
    %226 = vector.extract_strided_slice %216 {offsets = [0, 96], sizes = [2, 32], strides = [1, 1]} : vector<2x128xf32> to vector<2x32xf32>
    %227 = math.tanh %226 : vector<2x32xf32>
    %228 = arith.mulf %224, %188 : vector<2x32xf32>
    %229 = arith.mulf %223, %227 : vector<2x32xf32>
    %230 = arith.addf %228, %229 : vector<2x32xf32>
    %231 = math.tanh %230 : vector<2x32xf32>
    %232 = arith.mulf %225, %231 : vector<2x32xf32>
    %233 = tpu.concatenate %232, %211 in 1 : vector<2x32xf32>, vector<2x32xf32> -> vector<2x64xf32>
    %234 = arith.truncf %233 : vector<2x64xf32> to vector<2x64xbf16>
    %cst_60 = arith.constant dense<0.000000e+00> : vector<2x128xf32>
    %235 = tpu.matmul %234, %122, %cst_60 {dimension_numbers = #tpu.dot_dimension_numbers<[1], [0], [0], [1], [0, 0, 1, 1], [], []>} : vector<2x64xbf16>, vector<64x128xbf16>, vector<2x128xf32> -> vector<2x128xf32>
    %236 = vector.broadcast %123 : vector<1x128xf32> to vector<2x128xf32>
    %237 = arith.addf %235, %236 : vector<2x128xf32>
    %238 = vector.extract_strided_slice %237 {offsets = [0, 0], sizes = [2, 96], strides = [1, 1]} : vector<2x128xf32> to vector<2x96xf32>
    %239 = arith.negf %238 : vector<2x96xf32>
    %240 = math.exp %239 : vector<2x96xf32>
    %cst_61 = arith.constant 1.000000e+00 : f32
    %241 = vector.broadcast %cst_61 : f32 to vector<2x96xf32>
    %242 = arith.addf %241, %240 : vector<2x96xf32>
    %243 = arith.divf %241, %242 : vector<2x96xf32>
    %244 = vector.extract_strided_slice %243 {offsets = [0, 0], sizes = [2, 32], strides = [1, 1]} : vector<2x96xf32> to vector<2x32xf32>
    %245 = vector.extract_strided_slice %243 {offsets = [0, 32], sizes = [2, 32], strides = [1, 1]} : vector<2x96xf32> to vector<2x32xf32>
    %246 = vector.extract_strided_slice %243 {offsets = [0, 64], sizes = [2, 32], strides = [1, 1]} : vector<2x96xf32> to vector<2x32xf32>
    %247 = vector.extract_strided_slice %237 {offsets = [0, 96], sizes = [2, 32], strides = [1, 1]} : vector<2x128xf32> to vector<2x32xf32>
    %248 = math.tanh %247 : vector<2x32xf32>
    %249 = arith.mulf %245, %209 : vector<2x32xf32>
    %250 = arith.mulf %244, %248 : vector<2x32xf32>
    %251 = arith.addf %249, %250 : vector<2x32xf32>
    %252 = math.tanh %251 : vector<2x32xf32>
    %253 = arith.mulf %246, %252 : vector<2x32xf32>
    %254 = vector.extract_strided_slice %120 {offsets = [0, 3, 0], sizes = [2, 1, 128], strides = [1, 1, 1]} : vector<2x4x128xf32> to vector<2x1x128xf32>
    %255 = vector.shape_cast %254 : vector<2x1x128xf32> to vector<2x128xf32>
    %256 = arith.truncf %232 : vector<2x32xf32> to vector<2x32xbf16>
    %cst_62 = arith.constant dense<0.000000e+00> : vector<2x128xf32>
    %257 = tpu.matmul %256, %121, %cst_62 {dimension_numbers = #tpu.dot_dimension_numbers<[1], [0], [0], [1], [0, 0, 1, 1], [], []>} : vector<2x32xbf16>, vector<32x128xbf16>, vector<2x128xf32> -> vector<2x128xf32>
    %258 = arith.addf %255, %257 : vector<2x128xf32>
    %259 = vector.extract_strided_slice %258 {offsets = [0, 0], sizes = [2, 96], strides = [1, 1]} : vector<2x128xf32> to vector<2x96xf32>
    %260 = arith.negf %259 : vector<2x96xf32>
    %261 = math.exp %260 : vector<2x96xf32>
    %cst_63 = arith.constant 1.000000e+00 : f32
    %262 = vector.broadcast %cst_63 : f32 to vector<2x96xf32>
    %263 = arith.addf %262, %261 : vector<2x96xf32>
    %264 = arith.divf %262, %263 : vector<2x96xf32>
    %265 = vector.extract_strided_slice %264 {offsets = [0, 0], sizes = [2, 32], strides = [1, 1]} : vector<2x96xf32> to vector<2x32xf32>
    %266 = vector.extract_strided_slice %264 {offsets = [0, 32], sizes = [2, 32], strides = [1, 1]} : vector<2x96xf32> to vector<2x32xf32>
    %267 = vector.extract_strided_slice %264 {offsets = [0, 64], sizes = [2, 32], strides = [1, 1]} : vector<2x96xf32> to vector<2x32xf32>
    %268 = vector.extract_strided_slice %258 {offsets = [0, 96], sizes = [2, 32], strides = [1, 1]} : vector<2x128xf32> to vector<2x32xf32>
    %269 = math.tanh %268 : vector<2x32xf32>
    %270 = arith.mulf %266, %230 : vector<2x32xf32>
    %271 = arith.mulf %265, %269 : vector<2x32xf32>
    %272 = arith.addf %270, %271 : vector<2x32xf32>
    %273 = math.tanh %272 : vector<2x32xf32>
    %274 = arith.mulf %267, %273 : vector<2x32xf32>
    %275 = tpu.concatenate %274, %253 in 1 : vector<2x32xf32>, vector<2x32xf32> -> vector<2x64xf32>
    %276 = arith.truncf %275 : vector<2x64xf32> to vector<2x64xbf16>
    %cst_64 = arith.constant dense<0.000000e+00> : vector<2x128xf32>
    %277 = tpu.matmul %276, %122, %cst_64 {dimension_numbers = #tpu.dot_dimension_numbers<[1], [0], [0], [1], [0, 0, 1, 1], [], []>} : vector<2x64xbf16>, vector<64x128xbf16>, vector<2x128xf32> -> vector<2x128xf32>
    %278 = vector.broadcast %123 : vector<1x128xf32> to vector<2x128xf32>
    %279 = arith.addf %277, %278 : vector<2x128xf32>
    %280 = vector.extract_strided_slice %279 {offsets = [0, 0], sizes = [2, 96], strides = [1, 1]} : vector<2x128xf32> to vector<2x96xf32>
    %281 = arith.negf %280 : vector<2x96xf32>
    %282 = math.exp %281 : vector<2x96xf32>
    %cst_65 = arith.constant 1.000000e+00 : f32
    %283 = vector.broadcast %cst_65 : f32 to vector<2x96xf32>
    %284 = arith.addf %283, %282 : vector<2x96xf32>
    %285 = arith.divf %283, %284 : vector<2x96xf32>
    %286 = vector.extract_strided_slice %285 {offsets = [0, 0], sizes = [2, 32], strides = [1, 1]} : vector<2x96xf32> to vector<2x32xf32>
    %287 = vector.extract_strided_slice %285 {offsets = [0, 32], sizes = [2, 32], strides = [1, 1]} : vector<2x96xf32> to vector<2x32xf32>
    %288 = vector.extract_strided_slice %285 {offsets = [0, 64], sizes = [2, 32], strides = [1, 1]} : vector<2x96xf32> to vector<2x32xf32>
    %289 = vector.extract_strided_slice %279 {offsets = [0, 96], sizes = [2, 32], strides = [1, 1]} : vector<2x128xf32> to vector<2x32xf32>
    %290 = math.tanh %289 : vector<2x32xf32>
    %291 = arith.mulf %287, %251 : vector<2x32xf32>
    %292 = arith.mulf %286, %290 : vector<2x32xf32>
    %293 = arith.addf %291, %292 : vector<2x32xf32>
    %294 = math.tanh %293 : vector<2x32xf32>
    %295 = arith.mulf %288, %294 : vector<2x32xf32>
    %296 = arith.truncf %295 : vector<2x32xf32> to vector<2x32xbf16>
    %c0_66 = arith.constant 0 : index
    %c0_67 = arith.constant 0 : index
    %297 = vector.load %arg10[%c0_66, %c0_67] : memref<32x128xbf16, #tpu.memory_space<vmem>>, vector<32x128xbf16>
    %cst_68 = arith.constant dense<0.000000e+00> : vector<2x128xf32>
    %298 = tpu.matmul %296, %297, %cst_68 {dimension_numbers = #tpu.dot_dimension_numbers<[1], [0], [0], [1], [0, 0, 1, 1], [], []>} : vector<2x32xbf16>, vector<32x128xbf16>, vector<2x128xf32> -> vector<2x128xf32>
    %c0_69 = arith.constant 0 : index
    %c0_70 = arith.constant 0 : index
    %299 = vector.load %arg11[%c0_69, %c0_70] : memref<1x128xf32, #tpu.memory_space<vmem>>, vector<1x128xf32>
    %300 = vector.broadcast %299 : vector<1x128xf32> to vector<2x128xf32>
    %301 = arith.addf %298, %300 : vector<2x128xf32>
    %c0_71 = arith.constant 0 : index
    %c0_72 = arith.constant 0 : index
    %302 = vector.load %arg12[%c0_71, %c0_72] : memref<2x128xf32, #tpu.memory_space<vmem>>, vector<2x128xf32>
    tpu.vector_store %arg12[%c0_71, %c0_72], %301 {strides = array<i32>} : memref<2x128xf32, #tpu.memory_space<vmem>>, vector<2x128xf32>,
    return
  }
}

</mosaic_0001>

<llo_original>
// kernel: cnn_lstm_forward.1
$region0: #{cnn_lstm_forward.1}
  #allocation0 [shape = 'u32[]', space=smem, size = 0x4, offset = 0x4, fixed_abs, tag = 'smem constant byte address 0x4 - core index']
  #allocation1 [shape = 'u32[72,128]{1,0:T(1,128)}', space=vmem, size = 0x9000, scoped, tag = 'internal scratch']
  %s0 = inlined_call_operand.vmem [shape: f32[32,1], index: 0, kind: input, shape index: {}]
  %s1 = inlined_call_operand.vmem [shape: f32[3,64], index: 1, kind: input, shape index: {}]
  %s2 = inlined_call_operand.vmem [shape: f32[1,64], index: 2, kind: input, shape index: {}]
  %s3 = inlined_call_operand.hbm [shape: bf16[3,64,128], index: 3, kind: input, shape index: {}]
  %s4 = inlined_call_operand.vmem [shape: f32[1,128], index: 4, kind: input, shape index: {}]
  %s5 = inlined_call_operand.hbm [shape: bf16[128,128], index: 5, kind: input, shape index: {}]
  %s6 = inlined_call_operand.hbm [shape: bf16[32,128], index: 6, kind: input, shape index: {}]
  %s7 = inlined_call_operand.vmem [shape: f32[1,128], index: 7, kind: input, shape index: {}]
  %s8 = inlined_call_operand.vmem [shape: bf16[64,128], index: 8, kind: input, shape index: {}]
  %s9 = inlined_call_operand.vmem [shape: f32[1,128], index: 9, kind: input, shape index: {}]
  %s10 = inlined_call_operand.hbm [shape: bf16[32,128], index: 10, kind: input, shape index: {}]
  %s11 = inlined_call_operand.vmem [shape: f32[1,128], index: 11, kind: input, shape index: {}]
  %s12 = inlined_call_operand.hbm [shape: f32[2,128], index: 12, kind: output, shape index: {}]
  %s13 = sld [smem:[#allocation0]]
  $region74: #{cnn_lstm_forward.1} parent=0
    _
  %s15 = ssub.s32 1, %s13
  %s16 = scalar_select 0, %s15, %s13
  $region1: #{cnn_lstm_forward.1} parent=0
    #allocation2 [shape = 'u8[49152]{0}', space=vmem, size = 0xc000, scoped, tag = 'input window, operand 3, single buffered']
    #allocation3 [shape = 's32[1]{0}', space=sflag, size = 0x4, scoped, tag = 'scoped memory for cnn_lstm_forward.1']
    #allocation4 [shape = 's32[1]{0}', space=sflag, size = 0x4, scoped, tag = 'scoped memory for cnn_lstm_forward.1']
    #allocation5 [shape = 'u8[32768]{0}', space=vmem, size = 0x8000, scoped, tag = 'input window, operand 5, single buffered']
    #allocation6 [shape = 's32[1]{0}', space=sflag, size = 0x4, scoped, tag = 'scoped memory for cnn_lstm_forward.1']
    #allocation7 [shape = 'u8[8192]{0}', space=vmem, size = 0x2000, scoped, tag = 'input window, operand 6, single buffered']
    #allocation8 [shape = 'u8[8192]{0}', space=vmem, size = 0x2000, scoped, tag = 'input window, operand 10, single buffered']
    #allocation9 [shape = 's32[1]{0}', space=sflag, size = 0x4, scoped, tag = 'scoped memory for cnn_lstm_forward.1']
    #allocation10 [shape = 'u8[1024]{0}', space=vmem, size = 0x400, scoped, tag = 'output window, operand 0, single buffered']
    %17 = vsyncpa [#allocation3], 0
    %18 = vsyncpa [#allocation6], 0
    %19 = vsyncpa [#allocation9], 0
    %20 = vsyncpa [#allocation4], 0
    // Predicated region
    $region2: #{cnn_lstm_forward.1} parent=1 // pred_check
      _
    $region3: #{cnn_lstm_forward.1} parent=1 // pred_check_branch
      %22 = sbr.rel (0) target = $region5
    $region4: #{cnn_lstm_forward.1} parent=1 // pred_region
      _
    $region5: #{cnn_lstm_forward.1} parent=1 // pred_fallthru
      _
    // Predicated region
    $region6: #{cnn_lstm_forward.1} parent=1 // pred_check
      _
    $region7: #{cnn_lstm_forward.1} parent=1 // pred_check_branch
      %24 = sbr.rel (0) target = $region9
    $region8: #{cnn_lstm_forward.1} parent=1 // pred_region
      _
    $region9: #{cnn_lstm_forward.1} parent=1 // pred_fallthru
      _
    // Predicated region
    $region10: #{cnn_lstm_forward.1} parent=1 // pred_check
      _
    $region11: #{cnn_lstm_forward.1} parent=1 // pred_check_branch
      %26 = sbr.rel (0) target = $region13
    $region12: #{cnn_lstm_forward.1} parent=1 // pred_region
      _
    $region13: #{cnn_lstm_forward.1} parent=1 // pred_fallthru
      _
    // Predicated region
    $region14: #{cnn_lstm_forward.1} parent=1 // pred_check
      _
    $region15: #{cnn_lstm_forward.1} parent=1 // pred_check_branch
      %28 = sbr.rel (0) target = $region17
    $region16: #{cnn_lstm_forward.1} parent=1 // pred_region
      %30 = vsyncadd [#allocation3], 0
      %s31 = sshll.u32 %s3, 4
      %s32 = int_to_ptr.hbm [resolvable:$true] %s31
      %s33 = sshll.u32 [#allocation2], 4
      %s34 = int_to_ptr.vmem [resolvable:$true] %s33
      %39 = dma.hbm_to_vmem [thread:$0]  %s32, 1536, %s34, [#allocation3], 64, 64, 4
    $region17: #{cnn_lstm_forward.1} parent=1 // pred_fallthru
      _
    // Predicated region
    $region18: #{cnn_lstm_forward.1} parent=1 // pred_check
      _
    $region19: #{cnn_lstm_forward.1} parent=1 // pred_check_branch
      %41 = sbr.rel (0) target = $region21
    $region20: #{cnn_lstm_forward.1} parent=1 // pred_region
      _
    $region21: #{cnn_lstm_forward.1} parent=1 // pred_fallthru
      _
    // Predicated region
    $region22: #{cnn_lstm_forward.1} parent=1 // pred_check
      _
    $region23: #{cnn_lstm_forward.1} parent=1 // pred_check_branch
      %43 = sbr.rel (0) target = $region25
    $region24: #{cnn_lstm_forward.1} parent=1 // pred_region
      %45 = vsyncadd [#allocation6], 0
      %s46 = sshll.u32 %s5, 4
      %s47 = int_to_ptr.hbm [resolvable:$true] %s46
      %s48 = sshll.u32 [#allocation5], 4
      %s49 = int_to_ptr.vmem [resolvable:$true] %s48
      %54 = dma.hbm_to_vmem [thread:$0]  %s47, 1024, %s49, [#allocation6], 64, 64, 4
    $region25: #{cnn_lstm_forward.1} parent=1 // pred_fallthru
      _
    // Predicated region
    $region26: #{cnn_lstm_forward.1} parent=1 // pred_check
      _
    $region27: #{cnn_lstm_forward.1} parent=1 // pred_check_branch
      %56 = sbr.rel (0) target = $region29
    $region28: #{cnn_lstm_forward.1} parent=1 // pred_region
      %58 = vsyncadd [#allocation6], 0
      %s59 = sshll.u32 %s6, 4
      %s60 = int_to_ptr.hbm [resolvable:$true] %s59
      %s61 = sshll.u32 [#allocation7], 4
      %s62 = int_to_ptr.vmem [resolvable:$true] %s61
      %67 = dma.hbm_to_vmem [thread:$0]  %s60, 256, %s62, [#allocation6], 64, 64, 4
    $region29: #{cnn_lstm_forward.1} parent=1 // pred_fallthru
      _
    // Predicated region
    $region30: #{cnn_lstm_forward.1} parent=1 // pred_check
      _
    $region31: #{cnn_lstm_forward.1} parent=1 // pred_check_branch
      %69 = sbr.rel (0) target = $region33
    $region32: #{cnn_lstm_forward.1} parent=1 // pred_region
      _
    $region33: #{cnn_lstm_forward.1} parent=1 // pred_fallthru
      _
    // Predicated region
    $region34: #{cnn_lstm_forward.1} parent=1 // pred_check
      _
    $region35: #{cnn_lstm_forward.1} parent=1 // pred_check_branch
      %71 = sbr.rel (0) target = $region37
    $region36: #{cnn_lstm_forward.1} parent=1 // pred_region
      _
    $region37: #{cnn_lstm_forward.1} parent=1 // pred_fallthru
      _
    // Predicated region
    $region38: #{cnn_lstm_forward.1} parent=1 // pred_check
      _
    $region39: #{cnn_lstm_forward.1} parent=1 // pred_check_branch
      %73 = sbr.rel (0) target = $region41
    $region40: #{cnn_lstm_forward.1} parent=1 // pred_region
      _
    $region41: #{cnn_lstm_forward.1} parent=1 // pred_fallthru
      _
    // Predicated region
    $region42: #{cnn_lstm_forward.1} parent=1 // pred_check
      _
    $region43: #{cnn_lstm_forward.1} parent=1 // pred_check_branch
      %75 = sbr.rel (0) target = $region45
    $region44: #{cnn_lstm_forward.1} parent=1 // pred_region
      %77 = vsyncadd [#allocation9], 0
      %s78 = sshll.u32 %s10, 4
      %s79 = int_to_ptr.hbm [resolvable:$true] %s78
      %s80 = sshll.u32 [#allocation8], 4
      %s81 = int_to_ptr.vmem [resolvable:$true] %s80
      %86 = dma.hbm_to_vmem [thread:$0]  %s79, 256, %s81, [#allocation9], 64, 64, 4
    $region45: #{cnn_lstm_forward.1} parent=1 // pred_fallthru
      _
    // Predicated region
    $region46: #{cnn_lstm_forward.1} parent=1 // pred_check
      _
    $region47: #{cnn_lstm_forward.1} parent=1 // pred_check_branch
      %88 = sbr.rel (0) target = $region49
    $region48: #{cnn_lstm_forward.1} parent=1 // pred_region
      _
    $region49: #{cnn_lstm_forward.1} parent=1 // pred_fallthru
      _
    // Predicated region
    $region50: #{cnn_lstm_forward.1} parent=1 // pred_check
      _
    $region51: #{cnn_lstm_forward.1} parent=1 // pred_check_branch
      %90 = sbr.rel (0) target = $region53
    $region52: #{cnn_lstm_forward.1} parent=1 // pred_region
      %92 = dma.done [#allocation3], 1536
    $region53: #{cnn_lstm_forward.1} parent=1 // pred_fallthru
      _
    // Predicated region
    $region54: #{cnn_lstm_forward.1} parent=1 // pred_check
      _
    $region55: #{cnn_lstm_forward.1} parent=1 // pred_check_branch
      %94 = sbr.rel (0) target = $region57
    $region56: #{cnn_lstm_forward.1} parent=1 // pred_region
      %96 = dma.done [#allocation6], 1024
    $region57: #{cnn_lstm_forward.1} parent=1 // pred_fallthru
      _
    // Predicated region
    $region58: #{cnn_lstm_forward.1} parent=1 // pred_check
      _
    $region59: #{cnn_lstm_forward.1} parent=1 // pred_check_branch
      %98 = sbr.rel (0) target = $region61
    $region60: #{cnn_lstm_forward.1} parent=1 // pred_region
      %100 = dma.done [#allocation6], 256
    $region61: #{cnn_lstm_forward.1} parent=1 // pred_fallthru
      _
    // Predicated region
    $region62: #{cnn_lstm_forward.1} parent=1 // pred_check
      _
    $region63: #{cnn_lstm_forward.1} parent=1 // pred_check_branch
      %102 = sbr.rel (0) target = $region65
    $region64: #{cnn_lstm_forward.1} parent=1 // pred_region
      %104 = dma.done [#allocation9], 256
    $region65: #{cnn_lstm_forward.1} parent=1 // pred_fallthru
      _
    %v106 = vlaneseq
    %v107 = vshrl.u32 %v106, 7
    %v108 = vadd.s32 %v107, 8
    %v109 = vadd.s32 %v107, 16
    %v110 = vadd.s32 %v107, 24
    %vm111 = vcmp.lt.s32.totalorder %v107, 0
    %v112 = vsub.s32 0, %v107
    %v113 = vsel %vm111, %v112, %v107
    %v114 = vshrl.u32 %v113, 4
    %v115 = vand.u32 %v113, 15
    %v116 = vsub.s32 0, %v115
    %v117 = vsel %vm111, %v116, %v115
    %vm118 = vcmp.lt.s32.totalorder %v108, 0
    %v119 = vsub.s32 0, %v108
    %v120 = vsel %vm118, %v119, %v108
    %v121 = vshrl.u32 %v120, 4
    %v122 = vand.u32 %v120, 15
    %v123 = vsub.s32 0, %v122
    %v124 = vsel %vm118, %v123, %v122
    %vm125 = vcmp.lt.s32.totalorder %v109, 0
    %v126 = vsub.s32 0, %v109
    %v127 = vsel %vm125, %v126, %v109
    %v128 = vshrl.u32 %v127, 4
    %v129 = vand.u32 %v127, 15
    %v130 = vsub.s32 0, %v129
    %v131 = vsel %vm125, %v130, %v129
    %vm132 = vcmp.lt.s32.totalorder %v110, 0
    %v133 = vsub.s32 0, %v110
    %v134 = vsel %vm132, %v133, %v110
    %v135 = vshrl.u32 %v134, 4
    %v136 = vand.u32 %v134, 15
    %v137 = vsub.s32 0, %v136
    %v138 = vsel %vm132, %v137, %v136
    %vm139 = vcmp.ne.s32.totalorder %v117, 0
    %vm140 = vcmp.ne.s32.totalorder %v124, 0
    %vm141 = vcmp.ne.s32.totalorder %v131, 0
    %vm142 = vcmp.ne.s32.totalorder %v138, 0
    %vm143 = vcmp.lt.s32.totalorder %v117, 0
    %vm144 = vcmp.lt.s32.totalorder %v124, 0
    %vm145 = vcmp.lt.s32.totalorder %v131, 0
    %vm146 = vcmp.lt.s32.totalorder %v138, 0
    %vm147 = vmand %vm143, %vm139
    %vm148 = vmand %vm144, %vm140
    %vm149 = vmand %vm145, %vm141
    %vm150 = vmand %vm146, %vm142
    %v151 = vadd.s32 %v117, 16
    %v152 = vadd.s32 %v124, 16
    %v153 = vadd.s32 %v131, 16
    %v154 = vadd.s32 %v138, 16
    %v155 = vsel %vm147, %v151, %v117
    %v156 = vsel %vm148, %v152, %v124
    %v157 = vsel %vm149, %v153, %v131
    %v158 = vsel %vm150, %v154, %v138
    %vm159 = vcmp.eq.s32.totalorder %v155, 0
    %vm160 = vcmp.eq.s32.totalorder %v156, 0
    %vm161 = vcmp.eq.s32.totalorder %v157, 0
    %vm162 = vcmp.eq.s32.totalorder %v158, 0
    %vm163 = vcmp.eq.s32.totalorder %v155, 15
    %vm164 = vcmp.eq.s32.totalorder %v156, 15
    %vm165 = vcmp.eq.s32.totalorder %v157, 15
    %vm166 = vcmp.eq.s32.totalorder %v158, 15
    %vm167 = vcmp.lt.s32.totalorder %v107, 0
    %v168 = vsub.s32 0, %v107
    %v169 = vsel %vm167, %v168, %v107
    %v170 = vshrl.u32 %v169, 3
    %v171 = vand.u32 %v169, 7
    %v172 = vsub.s32 0, %v171
    %v173 = vsel %vm167, %v172, %v171
    %vm174 = vcmp.lt.s32.totalorder %v108, 0
    %v175 = vsub.s32 0, %v108
    %v176 = vsel %vm174, %v175, %v108
    %v177 = vshrl.u32 %v176, 3
    %v178 = vand.u32 %v176, 7
    %v179 = vsub.s32 0, %v178
    %v180 = vsel %vm174, %v179, %v178
    %vm181 = vcmp.ne.s32.totalorder %v173, 0
    %vm182 = vcmp.ne.s32.totalorder %v180, 0
    %vm183 = vcmp.lt.s32.totalorder %v173, 0
    %vm184 = vcmp.lt.s32.totalorder %v180, 0
    %vm185 = vmand %vm183, %vm181
    %vm186 = vmand %vm184, %vm182
    %v187 = vadd.s32 %v173, 8
    %v188 = vadd.s32 %v180, 8
    %v189 = vsel %vm185, %v187, %v173
    %v190 = vsel %vm186, %v188, %v180
    %vm191 = vcmp.eq.s32.totalorder %v189, 0
    %vm192 = vcmp.eq.s32.totalorder %v190, 0
    %vm193 = vcmp.eq.s32.totalorder %v189, 7
    %vm194 = vcmp.eq.s32.totalorder %v190, 7
    %v195 = vld [vmem:[%s0] sm:$0xff]
    %v196 = vld [vmem:[%s0 + $0x8] sm:$0xff]
    %v197 = vld [vmem:[%s0 + $0x10] sm:$0xff]
    %v198 = vld [vmem:[%s0 + $0x18] sm:$0xff]
    %v199 = vld [vmem:[%s1] sm:$0x7]
    %201 = vset.pattern.permute.xlu0 0
    %202 = vperm.xlu0 %201, %v195
    %v203 = vpop.permute.xlu0 %202
    %206 = vset.pattern.permute.xlu0 0
    %207 = vperm.xlu0 %206, %v196
    %v208 = vpop.permute.xlu0 %207
    %211 = vset.pattern.permute.xlu0 0
    %212 = vperm.xlu0 %211, %v197
    %v213 = vpop.permute.xlu0 %212
    %216 = vset.pattern.permute.xlu0 0
    %217 = vperm.xlu0 %216, %v198
    %v218 = vpop.permute.xlu0 %217
    %v220 = vperm.slane %v199, 0
    %v221 = vmul.f32 %v203, %v220
    %v222 = vmul.f32 %v208, %v220
    %v223 = vmul.f32 %v213, %v220
    %v224 = vmul.f32 %v218, %v220
    %v225 = vperm.slane %v199, 1
    %v226 = vmul.f32 %v203, %v225
    %v227 = vmul.f32 %v208, %v225
    %v228 = vmul.f32 %v213, %v225
    %v229 = vmul.f32 %v218, %v225
    %v230 = vperm.slane %v199, 2
    %v231 = vmul.f32 %v203, %v230
    %v232 = vmul.f32 %v208, %v230
    %v233 = vmul.f32 %v213, %v230
    %v234 = vmul.f32 %v218, %v230
    %v235 = vrot.slane %v221, 7
    %v236 = vrot.slane %v222, 7
    %v237 = vrot.slane %v223, 7
    %v238 = vrot.slane %v224, 7
    %vm239 = vcmp.lt.s32.totalorder %v107, 1
    %v240 = vsel %vm239, %v237, %v238
    %v241 = vsel %vm239, %v236, %v237
    %v242 = vsel %vm239, %v235, %v236
    %v243 = vsel %vm239, %v238, %v235
    %v244 = vsel %vm159, 1, 0
    %v245 = vsel %vm160, 1, 0
    %v246 = vsel %vm161, 1, 0
    %v247 = vsel %vm162, 1, 0
    %vm248 = vcmp.eq.s32.totalorder %v244, 1
    %vm249 = vcmp.eq.s32.totalorder %v245, 1
    %vm250 = vcmp.eq.s32.totalorder %v246, 1
    %vm251 = vcmp.eq.s32.totalorder %v247, 1
    %v252 = vsel %vm248, 0.0, %v243
    %v253 = vsel %vm249, 0.0, %v242
    %v254 = vsel %vm250, 0.0, %v241
    %v255 = vsel %vm251, 0.0, %v240
    %v256 = vadd.f32 %v252, %v226
    %v257 = vadd.f32 %v253, %v227
    %v258 = vadd.f32 %v254, %v228
    %v259 = vadd.f32 %v255, %v229
    %v260 = vrot.slane %v231, 1
    %v261 = vrot.slane %v232, 1
    %v262 = vrot.slane %v233, 1
    %v263 = vrot.slane %v234, 1
    %vm264 = vcmp.lt.s32.totalorder %v107, 7
    %v265 = vsel %vm264, %v262, %v263
    %v266 = vsel %vm264, %v261, %v262
    %v267 = vsel %vm264, %v260, %v261
    %v268 = vsel %vm264, %v263, %v260
    %v269 = vsel %vm163, 1, 0
    %v270 = vsel %vm164, 1, 0
    %v271 = vsel %vm165, 1, 0
    %v272 = vsel %vm166, 1, 0
    %vm273 = vcmp.eq.s32.totalorder %v269, 1
    %vm274 = vcmp.eq.s32.totalorder %v270, 1
    %vm275 = vcmp.eq.s32.totalorder %v271, 1
    %vm276 = vcmp.eq.s32.totalorder %v272, 1
    %v277 = vsel %vm273, 0.0, %v267
    %v278 = vsel %vm274, 0.0, %v266
    %v279 = vsel %vm275, 0.0, %v265
    %v280 = vsel %vm276, 0.0, %v268
    %v281 = vadd.f32 %v256, %v277
    %v282 = vadd.f32 %v257, %v278
    %v283 = vadd.f32 %v258, %v279
    %v284 = vadd.f32 %v259, %v280
    %v285 = vld [vmem:[%s2] sm:$0x1]
    %v287 = vperm.slane %v285, 0
    %v289 = vadd.f32 %v281, %v287
    %v290 = vadd.f32 %v282, %v287
    %v291 = vadd.f32 %v283, %v287
    %v292 = vadd.f32 %v284, %v287
    %v293 = vmax.f32 %v289, 0.0
    %v294 = vmax.f32 %v290, 0.0
    %v295 = vmax.f32 %v291, 0.0
    %v296 = vmax.f32 %v292, 0.0
    %v301 = vrot.slane %v293, 2
    %v302 = vrot.slane %v293, 4
    %v303 = vrot.slane %v293, 6
    %v304 = vrot.slane %v294, 2
    %v305 = vrot.slane %v294, 4
    %v306 = vrot.slane %v294, 6
    %v307 = vrot.slane %v295, 2
    %v308 = vrot.slane %v295, 4
    %v309 = vrot.slane %v295, 6
    %v310 = vrot.slane %v296, 2
    %v311 = vrot.slane %v296, 4
    %v312 = vrot.slane %v296, 6
    %v325 = vrot.slane %v293, 7
    %v326 = vrot.slane %v325, 2
    %v327 = vrot.slane %v301, 7
    %v328 = vrot.slane %v327, 2
    %v329 = vrot.slane %v302, 7
    %v330 = vrot.slane %v329, 2
    %v331 = vrot.slane %v303, 7
    %v332 = vrot.slane %v331, 2
    %v333 = vrot.slane %v294, 7
    %v334 = vrot.slane %v333, 2
    %v335 = vrot.slane %v304, 7
    %v336 = vrot.slane %v335, 2
    %v337 = vrot.slane %v305, 7
    %v338 = vrot.slane %v337, 2
    %v339 = vrot.slane %v306, 7
    %v340 = vrot.slane %v339, 2
    %v341 = vrot.slane %v295, 7
    %v342 = vrot.slane %v341, 2
    %v343 = vrot.slane %v307, 7
    %v344 = vrot.slane %v343, 2
    %v345 = vrot.slane %v308, 7
    %v346 = vrot.slane %v345, 2
    %v347 = vrot.slane %v309, 7
    %v348 = vrot.slane %v347, 2
    %v349 = vrot.slane %v296, 7
    %v350 = vrot.slane %v349, 2
    %v351 = vrot.slane %v310, 7
    %v352 = vrot.slane %v351, 2
    %v353 = vrot.slane %v311, 7
    %v354 = vrot.slane %v353, 2
    %v355 = vrot.slane %v312, 7
    %v356 = vrot.slane %v355, 2
    %v373 = vmax.f32 %v293, %v326
    %v374 = vmax.f32 %v301, %v328
    %v375 = vmax.f32 %v302, %v330
    %v376 = vmax.f32 %v303, %v332
    %v377 = vmax.f32 %v294, %v334
    %v378 = vmax.f32 %v304, %v336
    %v379 = vmax.f32 %v305, %v338
    %v380 = vmax.f32 %v306, %v340
    %v381 = vmax.f32 %v295, %v342
    %v382 = vmax.f32 %v307, %v344
    %v383 = vmax.f32 %v308, %v346
    %v384 = vmax.f32 %v309, %v348
    %v385 = vmax.f32 %v296, %v350
    %v386 = vmax.f32 %v310, %v352
    %v387 = vmax.f32 %v311, %v354
    %v388 = vmax.f32 %v312, %v356
    %v405 = vperm.slane %v373, 0
    %v406 = vperm.slane %v374, 0
    %v407 = vperm.slane %v375, 0
    %v408 = vperm.slane %v376, 0
    %v409 = vperm.slane %v377, 0
    %v410 = vperm.slane %v378, 0
    %v411 = vperm.slane %v379, 0
    %v412 = vperm.slane %v380, 0
    %v413 = vperm.slane %v381, 0
    %v414 = vperm.slane %v382, 0
    %v415 = vperm.slane %v383, 0
    %v416 = vperm.slane %v384, 0
    %v417 = vperm.slane %v385, 0
    %v418 = vperm.slane %v386, 0
    %v419 = vperm.slane %v387, 0
    %v420 = vperm.slane %v388, 0
    %vm421 = vcmask 1041409
    %v422 = vsel %vm421, %v406, %v405
    %vm423 = vcmask 1042434
    %v424 = vsel %vm423, %v407, %v422
    %vm425 = vcmask 1043459
    %v426 = vsel %vm425, %v408, %v424
    %vm427 = vcmask 1044484
    %v428 = vsel %vm427, %v409, %v426
    %vm429 = vcmask 1045509
    %v430 = vsel %vm429, %v410, %v428
    %vm431 = vcmask 1046534
    %v432 = vsel %vm431, %v411, %v430
    %vm433 = vcmask 1047559
    %v434 = vsel %vm433, %v412, %v432
    %v435 = vsel %vm421, %v414, %v413
    %v436 = vsel %vm423, %v415, %v435
    %v437 = vsel %vm425, %v416, %v436
    %v438 = vsel %vm427, %v417, %v437
    %v439 = vsel %vm429, %v418, %v438
    %v440 = vsel %vm431, %v419, %v439
    %v441 = vsel %vm433, %v420, %v440
    %v444 = vrot.slane %v434, 7
    %v445 = vrot.slane %v441, 7
    %v446 = vsel %vm239, %v444, %v445
    %v447 = vsel %vm239, %v445, %v444
    %v448 = vsel %vm191, 1, 0
    %v449 = vsel %vm192, 1, 0
    %vm450 = vcmp.eq.s32.totalorder %v448, 1
    %vm451 = vcmp.eq.s32.totalorder %v449, 1
    %v452 = vsel %vm450, 0.0, %v447
    %v453 = vsel %vm451, 0.0, %v446
    %v454 = vrot.slane %v434, 1
    %v455 = vrot.slane %v441, 1
    %v456 = vsel %vm264, %v454, %v455
    %v457 = vsel %vm264, %v455, %v454
    %v458 = vsel %vm193, 1, 0
    %v459 = vsel %vm194, 1, 0
    %vm460 = vcmp.eq.s32.totalorder %v458, 1
    %vm461 = vcmp.eq.s32.totalorder %v459, 1
    %v462 = vsel %vm460, 0.0, %v456
    %v463 = vsel %vm461, 0.0, %v457
    %v464 = vpack.c.bf16 %v453, %v452
    %v465 = vld [vmem:[#allocation2] sm:$0xf]
    %v466 = vld [vmem:[#allocation2 + $0x4] sm:$0xf]
    %v467 = vld [vmem:[#allocation2 + $0x8] sm:$0xf]
    %v468 = vld [vmem:[#allocation2 + $0xc] sm:$0xf]
    %v469 = vld [vmem:[#allocation2 + $0x10] sm:$0xf]
    %v470 = vld [vmem:[#allocation2 + $0x14] sm:$0xf]
    %v471 = vld [vmem:[#allocation2 + $0x18] sm:$0xf]
    %v472 = vld [vmem:[#allocation2 + $0x1c] sm:$0xf]
    %v473 = vpack.c.bf16 %v373, %v373
    %v474 = vpack.c.bf16 %v374, %v374
    %v475 = vpack.c.bf16 %v375, %v375
    %v476 = vpack.c.bf16 %v376, %v376
    %v477 = vpack.c.bf16 %v377, %v377
    %v478 = vpack.c.bf16 %v378, %v378
    %v479 = vpack.c.bf16 %v379, %v379
    %v480 = vpack.c.bf16 %v380, %v380
    %v481 = vpack.c.bf16 %v381, %v381
    %v482 = vpack.c.bf16 %v382, %v382
    %v483 = vpack.c.bf16 %v383, %v383
    %v484 = vpack.c.bf16 %v384, %v384
    %v485 = vpack.c.bf16 %v385, %v385
    %v486 = vpack.c.bf16 %v386, %v386
    %v487 = vpack.c.bf16 %v387, %v387
    %v488 = vpack.c.bf16 %v388, %v388
    %s489 = scalar_lea.vmem [#allocation2], 32
    %v490 = vld [vmem:[%s489] sm:$0xf]
    %v491 = vld [vmem:[%s489 + $0x4] sm:$0xf]
    %v492 = vld [vmem:[%s489 + $0x8] sm:$0xf]
    %v493 = vld [vmem:[%s489 + $0xc] sm:$0xf]
    %v494 = vld [vmem:[%s489 + $0x10] sm:$0xf]
    %v495 = vld [vmem:[%s489 + $0x14] sm:$0xf]
    %v496 = vld [vmem:[%s489 + $0x18] sm:$0xf]
    %v497 = vld [vmem:[%s489 + $0x1c] sm:$0xf]
    %v514 = vunpack.c.l.b16 %v473
    %v515 = vunpack.c.l.b16 %v474
    %v516 = vunpack.c.l.b16 %v475
    %v517 = vunpack.c.l.b16 %v476
    %v518 = vunpack.c.l.b16 %v477
    %v519 = vunpack.c.l.b16 %v478
    %v520 = vunpack.c.l.b16 %v479
    %v521 = vunpack.c.l.b16 %v480
    %v522 = vunpack.c.l.b16 %v481
    %v523 = vunpack.c.l.b16 %v482
    %v524 = vunpack.c.l.b16 %v483
    %v525 = vunpack.c.l.b16 %v484
    %v526 = vunpack.c.l.b16 %v485
    %v527 = vunpack.c.l.b16 %v486
    %v528 = vunpack.c.l.b16 %v487
    %v529 = vunpack.c.l.b16 %v488
    %v530 = vrot.slane %v515, 7
    %v531 = vsel %vm421, %v530, %v514
    %v532 = vrot.slane %v516, 6
    %v533 = vsel %vm423, %v532, %v531
    %v534 = vrot.slane %v517, 5
    %v535 = vsel %vm425, %v534, %v533
    %v536 = vrot.slane %v518, 4
    %v537 = vsel %vm427, %v536, %v535
    %v538 = vrot.slane %v519, 3
    %v539 = vsel %vm429, %v538, %v537
    %v540 = vrot.slane %v520, 2
    %v541 = vsel %vm431, %v540, %v539
    %v542 = vrot.slane %v521, 1
    %v543 = vsel %vm433, %v542, %v541
    %v544 = vrot.slane %v523, 7
    %v545 = vsel %vm421, %v544, %v522
    %v546 = vrot.slane %v524, 6
    %v547 = vsel %vm423, %v546, %v545
    %v548 = vrot.slane %v525, 5
    %v549 = vsel %vm425, %v548, %v547
    %v550 = vrot.slane %v526, 4
    %v551 = vsel %vm427, %v550, %v549
    %v552 = vrot.slane %v527, 3
    %v553 = vsel %vm429, %v552, %v551
    %v554 = vrot.slane %v528, 2
    %v555 = vsel %vm431, %v554, %v553
    %v556 = vrot.slane %v529, 1
    %v557 = vsel %vm433, %v556, %v555
    %v558 = vpack.c.b16 %v557, %v543
    %v567 = vunpack.c.l.b16 %v490
    %v568 = vunpack.c.l.b16 %v491
    %v569 = vunpack.c.l.b16 %v492
    %v570 = vunpack.c.l.b16 %v493
    %v571 = vunpack.c.l.b16 %v494
    %v572 = vunpack.c.l.b16 %v495
    %v573 = vunpack.c.l.b16 %v496
    %v574 = vunpack.c.l.b16 %v497
    %v575 = vpack.c.b16 %v568, %v567
    %v576 = vpack.c.b16 %v570, %v569
    %v577 = vpack.c.b16 %v572, %v571
    %v578 = vpack.c.b16 %v574, %v573
    %vm583 = vcmask 523264
    %v585 = vsel %vm583, %v558, 0
    %587 = vmatpush.bf16.msra.mxu0 0
    %588 = vmatpush.bf16.msra.mxu0 0
    %589 = vmatpush.bf16.msra.mxu0 0
    %590 = vmatpush.bf16.msra.mxu0 0
    %591 = vmatpush.bf16.msra.mxu0 %v578
    %592 = vmatpush.bf16.msra.mxu0 %v577
    %593 = vmatpush.bf16.msra.mxu0 %v576
    %594 = vmatpush.bf16.msra.mxu0 %v575
    %595 = vmatmul.bf16.gmra.mxu0 %v585
    %v596 = vpop.f32.mrf.mxu0
    %v597 = vadd.f32 0.0, %v596
    %v598 = vpop.f32.mrf.mxu0
    %v599 = vadd.f32 0.0, %v598
    %600 = vdwg.mxu0
    %v609 = vunpack.c.l.b16 %v465
    %v610 = vunpack.c.l.b16 %v466
    %v611 = vunpack.c.l.b16 %v467
    %v612 = vunpack.c.l.b16 %v468
    %v613 = vunpack.c.l.b16 %v469
    %v614 = vunpack.c.l.b16 %v470
    %v615 = vunpack.c.l.b16 %v471
    %v616 = vunpack.c.l.b16 %v472
    %v617 = vpack.c.b16 %v610, %v609
    %v618 = vpack.c.b16 %v612, %v611
    %v619 = vpack.c.b16 %v614, %v613
    %v620 = vpack.c.b16 %v616, %v615
    %v626 = vsel %vm583, %v464, 0
    %628 = vmatpush.bf16.msra.mxu0 0
    %629 = vmatpush.bf16.msra.mxu0 0
    %630 = vmatpush.bf16.msra.mxu0 0
    %631 = vmatpush.bf16.msra.mxu0 0
    %632 = vmatpush.bf16.msra.mxu0 %v620
    %633 = vmatpush.bf16.msra.mxu0 %v619
    %634 = vmatpush.bf16.msra.mxu0 %v618
    %635 = vmatpush.bf16.msra.mxu0 %v617
    %636 = vmatmul.bf16.gmra.mxu0 %v626
    %v637 = vpop.f32.mrf.mxu0
    %v638 = vadd.f32 %v597, %v637
    %v639 = vpop.f32.mrf.mxu0
    %v640 = vadd.f32 %v599, %v639
    %641 = vdwg.mxu0
    %v642 = vpack.c.bf16 %v463, %v462
    %s643 = scalar_lea.vmem [#allocation2], 64
    %v644 = vld [vmem:[%s643] sm:$0xf]
    %v645 = vld [vmem:[%s643 + $0x4] sm:$0xf]
    %v646 = vld [vmem:[%s643 + $0x8] sm:$0xf]
    %v647 = vld [vmem:[%s643 + $0xc] sm:$0xf]
    %v648 = vld [vmem:[%s643 + $0x10] sm:$0xf]
    %v649 = vld [vmem:[%s643 + $0x14] sm:$0xf]
    %v650 = vld [vmem:[%s643 + $0x18] sm:$0xf]
    %v651 = vld [vmem:[%s643 + $0x1c] sm:$0xf]
    %v660 = vunpack.c.l.b16 %v644
    %v661 = vunpack.c.l.b16 %v645
    %v662 = vunpack.c.l.b16 %v646
    %v663 = vunpack.c.l.b16 %v647
    %v664 = vunpack.c.l.b16 %v648
    %v665 = vunpack.c.l.b16 %v649
    %v666 = vunpack.c.l.b16 %v650
    %v667 = vunpack.c.l.b16 %v651
    %v668 = vpack.c.b16 %v661, %v660
    %v669 = vpack.c.b16 %v663, %v662
    %v670 = vpack.c.b16 %v665, %v664
    %v671 = vpack.c.b16 %v667, %v666
    %v677 = vsel %vm583, %v642, 0
    %679 = vmatpush.bf16.msra.mxu0 0
    %680 = vmatpush.bf16.msra.mxu0 0
    %681 = vmatpush.bf16.msra.mxu0 0
    %682 = vmatpush.bf16.msra.mxu0 0
    %683 = vmatpush.bf16.msra.mxu0 %v671
    %684 = vmatpush.bf16.msra.mxu0 %v670
    %685 = vmatpush.bf16.msra.mxu0 %v669
    %686 = vmatpush.bf16.msra.mxu0 %v668
    %687 = vmatmul.bf16.gmra.mxu0 %v677
    %v688 = vpop.f32.mrf.mxu0
    %v689 = vadd.f32 0.0, %v688
    %v690 = vpop.f32.mrf.mxu0
    %v691 = vadd.f32 0.0, %v690
    %692 = vdwg.mxu0
    %v693 = vadd.f32 %v638, %v689
    %v694 = vadd.f32 %v640, %v691
    %v695 = vld [vmem:[%s4] sm:$0x1]
    %v697 = vperm.slane %v695, 0
    %v699 = vadd.f32 %v693, %v697
    %v700 = vadd.f32 %v694, %v697
    %v701 = vmax.f32 %v699, 0.0
    %v702 = vmax.f32 %v700, 0.0
    %v705 = vrot.slane %v701, 2
    %v706 = vrot.slane %v701, 4
    %v707 = vrot.slane %v701, 6
    %v708 = vrot.slane %v702, 2
    %v709 = vrot.slane %v702, 4
    %v710 = vrot.slane %v702, 6
    %v717 = vrot.slane %v701, 7
    %v718 = vrot.slane %v717, 2
    %v719 = vrot.slane %v705, 7
    %v720 = vrot.slane %v719, 2
    %v721 = vrot.slane %v706, 7
    %v722 = vrot.slane %v721, 2
    %v723 = vrot.slane %v707, 7
    %v724 = vrot.slane %v723, 2
    %v725 = vrot.slane %v702, 7
    %v726 = vrot.slane %v725, 2
    %v727 = vrot.slane %v708, 7
    %v728 = vrot.slane %v727, 2
    %v729 = vrot.slane %v709, 7
    %v730 = vrot.slane %v729, 2
    %v731 = vrot.slane %v710, 7
    %v732 = vrot.slane %v731, 2
    %v741 = vmax.f32 %v701, %v718
    %v742 = vmax.f32 %v705, %v720
    %v743 = vmax.f32 %v706, %v722
    %v744 = vmax.f32 %v707, %v724
    %v745 = vmax.f32 %v702, %v726
    %v746 = vmax.f32 %v708, %v728
    %v747 = vmax.f32 %v709, %v730
    %v748 = vmax.f32 %v710, %v732
    %v749 = vpack.c.bf16 %v741, %v741
    %v750 = vpack.c.bf16 %v742, %v742
    %v751 = vpack.c.bf16 %v743, %v743
    %v752 = vpack.c.bf16 %v744, %v744
    %v753 = vpack.c.bf16 %v745, %v745
    %v754 = vpack.c.bf16 %v746, %v746
    %v755 = vpack.c.bf16 %v747, %v747
    %v756 = vpack.c.bf16 %v748, %v748
    %v757 = vld [vmem:[#allocation5] sm:$0xf]
    %v758 = vld [vmem:[#allocation5 + $0x4] sm:$0xf]
    %v759 = vld [vmem:[#allocation5 + $0x8] sm:$0xf]
    %v760 = vld [vmem:[#allocation5 + $0xc] sm:$0xf]
    %v761 = vld [vmem:[#allocation5 + $0x10] sm:$0xf]
    %v762 = vld [vmem:[#allocation5 + $0x14] sm:$0xf]
    %v763 = vld [vmem:[#allocation5 + $0x18] sm:$0xf]
    %v764 = vld [vmem:[#allocation5 + $0x1c] sm:$0xf]
    %v765 = vld [vmem:[#allocation5 + $0x20] sm:$0xf]
    %v766 = vld [vmem:[#allocation5 + $0x24] sm:$0xf]
    %v767 = vld [vmem:[#allocation5 + $0x28] sm:$0xf]
    %v768 = vld [vmem:[#allocation5 + $0x2c] sm:$0xf]
    %v769 = vld [vmem:[#allocation5 + $0x30] sm:$0xf]
    %v770 = vld [vmem:[#allocation5 + $0x34] sm:$0xf]
    %v771 = vld [vmem:[#allocation5 + $0x38] sm:$0xf]
    %v772 = vld [vmem:[#allocation5 + $0x3c] sm:$0xf]
    %v773 = vld [vmem:[%s7] sm:$0x1]
    %v775 = vperm.slane %v773, 0
    %v785 = vunpack.c.l.b16 %v749
    %v786 = vunpack.c.l.b16 %v750
    %v787 = vunpack.c.l.b16 %v751
    %v788 = vunpack.c.l.b16 %v752
    %v789 = vunpack.c.l.b16 %v753
    %v790 = vunpack.c.l.b16 %v754
    %v791 = vunpack.c.l.b16 %v755
    %v792 = vunpack.c.l.b16 %v756
    %v793 = vrot.slane %v786, 7
    %v794 = vsel %vm421, %v793, %v785
    %v795 = vrot.slane %v787, 6
    %v796 = vsel %vm423, %v795, %v794
    %v797 = vrot.slane %v788, 5
    %v798 = vsel %vm425, %v797, %v796
    %v799 = vrot.slane %v789, 4
    %v800 = vsel %vm427, %v799, %v798
    %v801 = vrot.slane %v790, 3
    %v802 = vsel %vm429, %v801, %v800
    %v803 = vrot.slane %v791, 2
    %v804 = vsel %vm431, %v803, %v802
    %v805 = vrot.slane %v792, 1
    %v806 = vsel %vm433, %v805, %v804
    %v807 = vpack.c.b16 %v806, %v806
    %v825 = vunpack.c.l.b16 %v757
    %v826 = vunpack.c.l.b16 %v758
    %v827 = vunpack.c.l.b16 %v759
    %v828 = vunpack.c.l.b16 %v760
    %v829 = vunpack.c.l.b16 %v761
    %v830 = vunpack.c.l.b16 %v762
    %v831 = vunpack.c.l.b16 %v763
    %v832 = vunpack.c.l.b16 %v764
    %v833 = vunpack.c.l.b16 %v765
    %v834 = vunpack.c.l.b16 %v766
    %v835 = vunpack.c.l.b16 %v767
    %v836 = vunpack.c.l.b16 %v768
    %v837 = vunpack.c.l.b16 %v769
    %v838 = vunpack.c.l.b16 %v770
    %v839 = vunpack.c.l.b16 %v771
    %v840 = vunpack.c.l.b16 %v772
    %v841 = vpack.c.b16 %v826, %v825
    %v842 = vpack.c.b16 %v828, %v827
    %v843 = vpack.c.b16 %v830, %v829
    %v844 = vpack.c.b16 %v832, %v831
    %v845 = vpack.c.b16 %v834, %v833
    %v846 = vpack.c.b16 %v836, %v835
    %v847 = vpack.c.b16 %v838, %v837
    %v848 = vpack.c.b16 %v840, %v839
    %857 = vmatpush.bf16.msra.mxu0 %v848
    %858 = vmatpush.bf16.msra.mxu0 %v847
    %859 = vmatpush.bf16.msra.mxu0 %v846
    %860 = vmatpush.bf16.msra.mxu0 %v845
    %861 = vmatpush.bf16.msra.mxu0 %v844
    %862 = vmatpush.bf16.msra.mxu0 %v843
    %863 = vmatpush.bf16.msra.mxu0 %v842
    %864 = vmatpush.bf16.msra.mxu0 %v841
    %865 = vmatmul.bf16.gmra.mxu0 %v807
    %v866 = vpop.f32.mrf.mxu0
    %v867 = vadd.f32 %v775, %v866
    %v868 = vpop.f32.mrf.mxu0
    %869 = vdwg.mxu0
    %v871 = vrot.slane %v867, 4
    %v873 = vld [vmem:[#allocation7] sm:$0xf]
    %v874 = vld [vmem:[#allocation7 + $0x4] sm:$0xf]
    %v875 = vld [vmem:[#allocation7 + $0x8] sm:$0xf]
    %v876 = vld [vmem:[#allocation7 + $0xc] sm:$0xf]
    %v877 = vld [vmem:[%s8] sm:$0xf]
    %v878 = vld [vmem:[%s8 + $0x4] sm:$0xf]
    %v879 = vld [vmem:[%s8 + $0x8] sm:$0xf]
    %v880 = vld [vmem:[%s8 + $0xc] sm:$0xf]
    %v881 = vld [vmem:[%s8 + $0x10] sm:$0xf]
    %v882 = vld [vmem:[%s8 + $0x14] sm:$0xf]
    %v883 = vld [vmem:[%s8 + $0x18] sm:$0xf]
    %v884 = vld [vmem:[%s8 + $0x1c] sm:$0xf]
    %v885 = vld [vmem:[%s9] sm:$0x1]
    %v890 = vunpack.c.l.b16 %v873
    %v891 = vunpack.c.l.b16 %v874
    %v892 = vunpack.c.l.b16 %v875
    %v893 = vunpack.c.l.b16 %v876
    %v894 = vpack.c.b16 %v891, %v890
    %v895 = vpack.c.b16 %v893, %v892
    %vm898 = vcmask 261120
    %v900 = vsel %vm898, 0, 0
    %902 = vmatpush.bf16.msra.mxu0 0
    %903 = vmatpush.bf16.msra.mxu0 0
    %904 = vmatpush.bf16.msra.mxu0 0
    %905 = vmatpush.bf16.msra.mxu0 0
    %906 = vmatpush.bf16.msra.mxu0 0
    %907 = vmatpush.bf16.msra.mxu0 0
    %908 = vmatpush.bf16.msra.mxu0 %v895
    %909 = vmatpush.bf16.msra.mxu0 %v894
    %910 = vmatmul.bf16.gmra.mxu0 %v900
    %v911 = vpop.f32.mrf.mxu0
    %v912 = vadd.f32 0.0, %v911
    %v913 = vpop.f32.mrf.mxu0
    %914 = vdwg.mxu0
    %v916 = vrot.slane %v912, 1
    %v919 = vadd.f32 %v867, %v912
    %v920 = vadd.f32 %v871, %v916
    %v921 = vxor.u32 %v919, 2147483648
    %v922 = vxor.u32 %v920, 2147483648
    %v923 = vmul.f32 %v921, 1.442695
    %v924 = vpow.pop %v923
    %v925 = vmul.f32 %v922, 1.442695
    %v926 = vpow.pop %v925
    %v927 = vadd.f32 %v924, 1.0
    %v928 = vadd.f32 %v926, 1.0
    %v929 = vrcp.pop %v927
    %v930 = vmul.f32 %v927, %v929
    %v931 = vsub.f32 1.0, %v930
    %v932 = vmul.f32 %v929, %v931
    %v933 = vadd.f32 %v929, %v932
    %vm934 = vweird.f32 %v927
    %vm935 = vweird.f32 %v929
    %vm936 = vmor %vm934, %vm935
    %v937 = vsel %vm936, %v929, %v933
    %v938 = vand.u32 2147483647, %v927
    %vm939 = vcmp.eq.f32.partialorder %v938, 8.507059e+37
    %v940 = vand.u32 %v927, 2147483648
    %v941 = vor.u32 1.1754944e-38, %v940
    %v942 = vsel %vm939, %v941, %v937
    %v943 = vmul.f32 1.0, %v942
    %v944 = vrcp.pop %v928
    %v945 = vmul.f32 %v928, %v944
    %v946 = vsub.f32 1.0, %v945
    %v947 = vmul.f32 %v944, %v946
    %v948 = vadd.f32 %v944, %v947
    %vm949 = vweird.f32 %v928
    %vm950 = vweird.f32 %v944
    %vm951 = vmor %vm949, %vm950
    %v952 = vsel %vm951, %v944, %v948
    %v953 = vand.u32 2147483647, %v928
    %vm954 = vcmp.eq.f32.partialorder %v953, 8.507059e+37
    %v955 = vand.u32 %v928, 2147483648
    %v956 = vor.u32 1.1754944e-38, %v955
    %v957 = vsel %vm954, %v956, %v952
    %v958 = vmul.f32 1.0, %v957
    %v959 = vtanh.pop %v919
    %v960 = vtanh.pop %v920
    %v961 = vmul.f32 %v943, 0.0
    %v962 = vmul.f32 %v958, 0.0
    %965 = vrot.lane.b32.xlu0 %v959, 32
    %v966 = vpop.permute.xlu0 %965
    %967 = vrot.lane.b32.xlu0 %v960, 32
    %v968 = vpop.permute.xlu0 %967
    %v971 = vmul.f32 %v943, %v966
    %v972 = vmul.f32 %v958, %v968
    %975 = vrot.lane.b32.xlu0 %v971, 32
    %v976 = vpop.permute.xlu0 %975
    %977 = vrot.lane.b32.xlu0 %v972, 32
    %v978 = vpop.permute.xlu0 %977
    %v981 = vadd.f32 %v961, %v976
    %v982 = vadd.f32 %v962, %v978
    %v983 = vtanh.pop %v981
    %v984 = vtanh.pop %v982
    %987 = vrot.lane.b32.xlu0 %v983, 32
    %v988 = vpop.permute.xlu0 %987
    %989 = vrot.lane.b32.xlu0 %v984, 32
    %v990 = vpop.permute.xlu0 %989
    %v993 = vmul.f32 %v943, %v988
    %v994 = vmul.f32 %v958, %v990
    %v997 = vperm.slane %v993, 0
    %v998 = vperm.slane %v994, 0
    %v999 = vsel %vm421, %v998, %v997
    %1000 = vrot.lane.b32.xlu0 %v999, 64
    %v1001 = vpop.permute.xlu0 %1000
    %v1003 = vsel %vm898, %v1001, 0.0
    %v1004 = vpack.c.bf16 %v1003, %v1003
    %v1006 = vperm.slane %v885, 0
    %v1016 = vunpack.c.l.b16 %v877
    %v1017 = vunpack.c.l.b16 %v878
    %v1018 = vunpack.c.l.b16 %v879
    %v1019 = vunpack.c.l.b16 %v880
    %v1020 = vunpack.c.l.b16 %v881
    %v1021 = vunpack.c.l.b16 %v882
    %v1022 = vunpack.c.l.b16 %v883
    %v1023 = vunpack.c.l.b16 %v884
    %v1024 = vpack.c.b16 %v1017, %v1016
    %v1025 = vpack.c.b16 %v1019, %v1018
    %v1026 = vpack.c.b16 %v1021, %v1020
    %v1027 = vpack.c.b16 %v1023, %v1022
    %v1033 = vsel %vm583, %v1004, 0
    %1035 = vmatpush.bf16.msra.mxu0 0
    %1036 = vmatpush.bf16.msra.mxu0 0
    %1037 = vmatpush.bf16.msra.mxu0 0
    %1038 = vmatpush.bf16.msra.mxu0 0
    %1039 = vmatpush.bf16.msra.mxu0 %v1027
    %1040 = vmatpush.bf16.msra.mxu0 %v1026
    %1041 = vmatpush.bf16.msra.mxu0 %v1025
    %1042 = vmatpush.bf16.msra.mxu0 %v1024
    %1043 = vmatmul.bf16.gmra.mxu0 %v1033
    %v1044 = vpop.f32.mrf.mxu0
    %v1045 = vadd.f32 %v1006, %v1044
    %v1046 = vpop.f32.mrf.mxu0
    %1047 = vdwg.mxu0
    %v1048 = vxor.u32 %v1045, 2147483648
    %v1049 = vmul.f32 %v1048, 1.442695
    %v1050 = vpow.pop %v1049
    %v1051 = vadd.f32 %v1050, 1.0
    %v1052 = vrcp.pop %v1051
    %v1053 = vmul.f32 %v1051, %v1052
    %v1054 = vsub.f32 1.0, %v1053
    %v1055 = vmul.f32 %v1052, %v1054
    %v1056 = vadd.f32 %v1052, %v1055
    %vm1057 = vweird.f32 %v1051
    %vm1058 = vweird.f32 %v1052
    %vm1059 = vmor %vm1057, %vm1058
    %v1060 = vsel %vm1059, %v1052, %v1056
    %v1061 = vand.u32 2147483647, %v1051
    %vm1062 = vcmp.eq.f32.partialorder %v1061, 8.507059e+37
    %v1063 = vand.u32 %v1051, 2147483648
    %v1064 = vor.u32 1.1754944e-38, %v1063
    %v1065 = vsel %vm1062, %v1064, %v1060
    %v1066 = vmul.f32 1.0, %v1065
    %v1067 = vtanh.pop %v1045
    %v1068 = vmul.f32 %v1066, 0.0
    %1070 = vrot.lane.b32.xlu0 %v1067, 32
    %v1071 = vpop.permute.xlu0 %1070
    %v1073 = vmul.f32 %v1066, %v1071
    %1075 = vrot.lane.b32.xlu0 %v1073, 32
    %v1076 = vpop.permute.xlu0 %1075
    %v1078 = vadd.f32 %v1068, %v1076
    %v1079 = vtanh.pop %v1078
    %1081 = vrot.lane.b32.xlu0 %v1079, 32
    %v1082 = vpop.permute.xlu0 %1081
    %v1084 = vmul.f32 %v1066, %v1082
    %v1085 = vpack.c.bf16 %v993, %v993
    %v1086 = vpack.c.bf16 %v994, %v994
    %v1089 = vunpack.c.l.b16 %v1085
    %v1090 = vunpack.c.l.b16 %v1086
    %v1091 = vrot.slane %v1090, 7
    %v1092 = vsel %vm421, %v1091, %v1089
    %v1093 = vpack.c.b16 %v1092, %v1092
    %1094 = vrot.lane.b32.xlu0 %v1093, 64
    %v1095 = vpop.permute.xlu0 %1094
    %v1097 = vsel %vm898, %v1095, 0
    %1099 = vmatpush.bf16.msra.mxu0 0
    %1100 = vmatpush.bf16.msra.mxu0 0
    %1101 = vmatpush.bf16.msra.mxu0 0
    %1102 = vmatpush.bf16.msra.mxu0 0
    %1103 = vmatpush.bf16.msra.mxu0 0
    %1104 = vmatpush.bf16.msra.mxu0 0
    %1105 = vmatpush.bf16.msra.mxu0 %v895
    %1106 = vmatpush.bf16.msra.mxu0 %v894
    %1107 = vmatmul.bf16.gmra.mxu0 %v1097
    %v1108 = vpop.f32.mrf.mxu0
    %v1109 = vadd.f32 0.0, %v1108
    %v1110 = vpop.f32.mrf.mxu0
    %1111 = vdwg.mxu0
    %v1113 = vrot.slane %v1109, 7
    %v1116 = vadd.f32 %v867, %v1113
    %v1117 = vadd.f32 %v871, %v1109
    %v1118 = vxor.u32 %v1116, 2147483648
    %v1119 = vxor.u32 %v1117, 2147483648
    %v1120 = vmul.f32 %v1118, 1.442695
    %v1121 = vpow.pop %v1120
    %v1122 = vmul.f32 %v1119, 1.442695
    %v1123 = vpow.pop %v1122
    %v1124 = vadd.f32 %v1121, 1.0
    %v1125 = vadd.f32 %v1123, 1.0
    %v1126 = vrcp.pop %v1124
    %v1127 = vmul.f32 %v1124, %v1126
    %v1128 = vsub.f32 1.0, %v1127
    %v1129 = vmul.f32 %v1126, %v1128
    %v1130 = vadd.f32 %v1126, %v1129
    %vm1131 = vweird.f32 %v1124
    %vm1132 = vweird.f32 %v1126
    %vm1133 = vmor %vm1131, %vm1132
    %v1134 = vsel %vm1133, %v1126, %v1130
    %v1135 = vand.u32 2147483647, %v1124
    %vm1136 = vcmp.eq.f32.partialorder %v1135, 8.507059e+37
    %v1137 = vand.u32 %v1124, 2147483648
    %v1138 = vor.u32 1.1754944e-38, %v1137
    %v1139 = vsel %vm1136, %v1138, %v1134
    %v1140 = vmul.f32 1.0, %v1139
    %v1141 = vrcp.pop %v1125
    %v1142 = vmul.f32 %v1125, %v1141
    %v1143 = vsub.f32 1.0, %v1142
    %v1144 = vmul.f32 %v1141, %v1143
    %v1145 = vadd.f32 %v1141, %v1144
    %vm1146 = vweird.f32 %v1125
    %vm1147 = vweird.f32 %v1141
    %vm1148 = vmor %vm1146, %vm1147
    %v1149 = vsel %vm1148, %v1141, %v1145
    %v1150 = vand.u32 2147483647, %v1125
    %vm1151 = vcmp.eq.f32.partialorder %v1150, 8.507059e+37
    %v1152 = vand.u32 %v1125, 2147483648
    %v1153 = vor.u32 1.1754944e-38, %v1152
    %v1154 = vsel %vm1151, %v1153, %v1149
    %v1155 = vmul.f32 1.0, %v1154
    %v1156 = vtanh.pop %v1116
    %v1157 = vtanh.pop %v1117
    %v1160 = vrot.slane %v981, 7
    %v1161 = vrot.slane %v982, 7
    %v1164 = vmul.f32 %v1140, %v1160
    %v1165 = vmul.f32 %v1155, %v1161
    %1168 = vrot.lane.b32.xlu0 %v1156, 32
    %v1169 = vpop.permute.xlu0 %1168
    %1170 = vrot.lane.b32.xlu0 %v1157, 32
    %v1171 = vpop.permute.xlu0 %1170
    %v1174 = vmul.f32 %v1140, %v1169
    %v1175 = vmul.f32 %v1155, %v1171
    %1178 = vrot.lane.b32.xlu0 %v1174, 32
    %v1179 = vpop.permute.xlu0 %1178
    %1180 = vrot.lane.b32.xlu0 %v1175, 32
    %v1181 = vpop.permute.xlu0 %1180
    %v1184 = vadd.f32 %v1164, %v1179
    %v1185 = vadd.f32 %v1165, %v1181
    %v1186 = vtanh.pop %v1184
    %v1187 = vtanh.pop %v1185
    %1190 = vrot.lane.b32.xlu0 %v1186, 32
    %v1191 = vpop.permute.xlu0 %1190
    %1192 = vrot.lane.b32.xlu0 %v1187, 32
    %v1193 = vpop.permute.xlu0 %1192
    %v1196 = vmul.f32 %v1140, %v1191
    %v1197 = vmul.f32 %v1155, %v1193
    %v1200 = vperm.slane %v1196, 1
    %v1201 = vperm.slane %v1197, 1
    %v1202 = vsel %vm423, %v1201, %v1200
    %1203 = vrot.lane.b32.xlu0 %v1202, 64
    %v1204 = vpop.permute.xlu0 %1203
    %v1207 = vrot.slane %v1084, 7
    %1208 = vrot.lane.b32.xlu0 %v1207, 96
    %v1209 = vpop.permute.xlu0 %1208
    %v1211 = vsel %vm898, %v1204, %v1209
    %v1212 = vpack.c.bf16 %v1211, %v1211
    %v1214 = vshrl.u32 %v1212, 16
    %v1216 = vshll.u32 %v1212, 16
    %v1218 = vrot.slane %v1216, 1
    %v1219 = vor.u32 %v1214, %v1218
    %v1221 = vsel %vm583, %v1219, 0
    %1223 = vmatpush.bf16.msra.mxu0 0
    %1224 = vmatpush.bf16.msra.mxu0 0
    %1225 = vmatpush.bf16.msra.mxu0 0
    %1226 = vmatpush.bf16.msra.mxu0 0
    %1227 = vmatpush.bf16.msra.mxu0 %v1027
    %1228 = vmatpush.bf16.msra.mxu0 %v1026
    %1229 = vmatpush.bf16.msra.mxu0 %v1025
    %1230 = vmatpush.bf16.msra.mxu0 %v1024
    %1231 = vmatmul.bf16.gmra.mxu0 %v1221
    %v1232 = vpop.f32.mrf.mxu0
    %v1233 = vadd.f32 %v1006, %v1232
    %v1234 = vpop.f32.mrf.mxu0
    %1235 = vdwg.mxu0
    %v1236 = vxor.u32 %v1233, 2147483648
    %v1237 = vmul.f32 %v1236, 1.442695
    %v1238 = vpow.pop %v1237
    %v1239 = vadd.f32 %v1238, 1.0
    %v1240 = vrcp.pop %v1239
    %v1241 = vmul.f32 %v1239, %v1240
    %v1242 = vsub.f32 1.0, %v1241
    %v1243 = vmul.f32 %v1240, %v1242
    %v1244 = vadd.f32 %v1240, %v1243
    %vm1245 = vweird.f32 %v1239
    %vm1246 = vweird.f32 %v1240
    %vm1247 = vmor %vm1245, %vm1246
    %v1248 = vsel %vm1247, %v1240, %v1244
    %v1249 = vand.u32 2147483647, %v1239
    %vm1250 = vcmp.eq.f32.partialorder %v1249, 8.507059e+37
    %v1251 = vand.u32 %v1239, 2147483648
    %v1252 = vor.u32 1.1754944e-38, %v1251
    %v1253 = vsel %vm1250, %v1252, %v1248
    %v1254 = vmul.f32 1.0, %v1253
    %v1255 = vtanh.pop %v1233
    %v1256 = vmul.f32 %v1254, %v1078
    %1258 = vrot.lane.b32.xlu0 %v1255, 32
    %v1259 = vpop.permute.xlu0 %1258
    %v1261 = vmul.f32 %v1254, %v1259
    %1263 = vrot.lane.b32.xlu0 %v1261, 32
    %v1264 = vpop.permute.xlu0 %1263
    %v1266 = vadd.f32 %v1256, %v1264
    %v1267 = vtanh.pop %v1266
    %1269 = vrot.lane.b32.xlu0 %v1267, 32
    %v1270 = vpop.permute.xlu0 %1269
    %v1272 = vmul.f32 %v1254, %v1270
    %v1273 = vpack.c.bf16 %v1196, %v1196
    %v1274 = vpack.c.bf16 %v1197, %v1197
    %v1277 = vunpack.c.l.b16 %v1273
    %v1278 = vunpack.c.l.b16 %v1274
    %v1279 = vrot.slane %v1277, 1
    %v1280 = vsel %vm421, %v1278, %v1279
    %v1281 = vpack.c.b16 %v1280, %v1280
    %1282 = vrot.lane.b32.xlu0 %v1281, 64
    %v1283 = vpop.permute.xlu0 %1282
    %v1285 = vsel %vm898, %v1283, 0
    %1287 = vmatpush.bf16.msra.mxu0 0
    %1288 = vmatpush.bf16.msra.mxu0 0
    %1289 = vmatpush.bf16.msra.mxu0 0
    %1290 = vmatpush.bf16.msra.mxu0 0
    %1291 = vmatpush.bf16.msra.mxu0 0
    %1292 = vmatpush.bf16.msra.mxu0 0
    %1293 = vmatpush.bf16.msra.mxu0 %v895
    %1294 = vmatpush.bf16.msra.mxu0 %v894
    %1295 = vmatmul.bf16.gmra.mxu0 %v1285
    %v1296 = vpop.f32.mrf.mxu0
    %v1297 = vadd.f32 0.0, %v1296
    %v1298 = vpop.f32.mrf.mxu0
    %1299 = vdwg.mxu0
    %v1301 = vrot.slane %v1297, 6
    %v1302 = vrot.slane %v1297, 7
    %v1305 = vadd.f32 %v867, %v1301
    %v1306 = vadd.f32 %v871, %v1302
    %v1307 = vxor.u32 %v1305, 2147483648
    %v1308 = vxor.u32 %v1306, 2147483648
    %v1309 = vmul.f32 %v1307, 1.442695
    %v1310 = vpow.pop %v1309
    %v1311 = vmul.f32 %v1308, 1.442695
    %v1312 = vpow.pop %v1311
    %v1313 = vadd.f32 %v1310, 1.0
    %v1314 = vadd.f32 %v1312, 1.0
    %v1315 = vrcp.pop %v1313
    %v1316 = vmul.f32 %v1313, %v1315
    %v1317 = vsub.f32 1.0, %v1316
    %v1318 = vmul.f32 %v1315, %v1317
    %v1319 = vadd.f32 %v1315, %v1318
    %vm1320 = vweird.f32 %v1313
    %vm1321 = vweird.f32 %v1315
    %vm1322 = vmor %vm1320, %vm1321
    %v1323 = vsel %vm1322, %v1315, %v1319
    %v1324 = vand.u32 2147483647, %v1313
    %vm1325 = vcmp.eq.f32.partialorder %v1324, 8.507059e+37
    %v1326 = vand.u32 %v1313, 2147483648
    %v1327 = vor.u32 1.1754944e-38, %v1326
    %v1328 = vsel %vm1325, %v1327, %v1323
    %v1329 = vmul.f32 1.0, %v1328
    %v1330 = vrcp.pop %v1314
    %v1331 = vmul.f32 %v1314, %v1330
    %v1332 = vsub.f32 1.0, %v1331
    %v1333 = vmul.f32 %v1330, %v1332
    %v1334 = vadd.f32 %v1330, %v1333
    %vm1335 = vweird.f32 %v1314
    %vm1336 = vweird.f32 %v1330
    %vm1337 = vmor %vm1335, %vm1336
    %v1338 = vsel %vm1337, %v1330, %v1334
    %v1339 = vand.u32 2147483647, %v1314
    %vm1340 = vcmp.eq.f32.partialorder %v1339, 8.507059e+37
    %v1341 = vand.u32 %v1314, 2147483648
    %v1342 = vor.u32 1.1754944e-38, %v1341
    %v1343 = vsel %vm1340, %v1342, %v1338
    %v1344 = vmul.f32 1.0, %v1343
    %v1345 = vtanh.pop %v1305
    %v1346 = vtanh.pop %v1306
    %v1349 = vrot.slane %v1184, 7
    %v1350 = vrot.slane %v1185, 7
    %v1353 = vmul.f32 %v1329, %v1349
    %v1354 = vmul.f32 %v1344, %v1350
    %1357 = vrot.lane.b32.xlu0 %v1345, 32
    %v1358 = vpop.permute.xlu0 %1357
    %1359 = vrot.lane.b32.xlu0 %v1346, 32
    %v1360 = vpop.permute.xlu0 %1359
    %v1363 = vmul.f32 %v1329, %v1358
    %v1364 = vmul.f32 %v1344, %v1360
    %1367 = vrot.lane.b32.xlu0 %v1363, 32
    %v1368 = vpop.permute.xlu0 %1367
    %1369 = vrot.lane.b32.xlu0 %v1364, 32
    %v1370 = vpop.permute.xlu0 %1369
    %v1373 = vadd.f32 %v1353, %v1368
    %v1374 = vadd.f32 %v1354, %v1370
    %v1375 = vtanh.pop %v1373
    %v1376 = vtanh.pop %v1374
    %1379 = vrot.lane.b32.xlu0 %v1375, 32
    %v1380 = vpop.permute.xlu0 %1379
    %1381 = vrot.lane.b32.xlu0 %v1376, 32
    %v1382 = vpop.permute.xlu0 %1381
    %v1385 = vmul.f32 %v1329, %v1380
    %v1386 = vmul.f32 %v1344, %v1382
    %v1389 = vperm.slane %v1385, 2
    %v1390 = vperm.slane %v1386, 2
    %v1391 = vsel %vm425, %v1390, %v1389
    %1392 = vrot.lane.b32.xlu0 %v1391, 64
    %v1393 = vpop.permute.xlu0 %1392
    %v1396 = vrot.slane %v1272, 6
    %1397 = vrot.lane.b32.xlu0 %v1396, 96
    %v1398 = vpop.permute.xlu0 %1397
    %v1400 = vsel %vm898, %v1393, %v1398
    %v1401 = vpack.c.bf16 %v1400, %v1400
    %v1403 = vrot.slane %v1401, 1
    %v1405 = vsel %vm583, %v1403, 0
    %1407 = vmatpush.bf16.msra.mxu0 0
    %1408 = vmatpush.bf16.msra.mxu0 0
    %1409 = vmatpush.bf16.msra.mxu0 0
    %1410 = vmatpush.bf16.msra.mxu0 0
    %1411 = vmatpush.bf16.msra.mxu0 %v1027
    %1412 = vmatpush.bf16.msra.mxu0 %v1026
    %1413 = vmatpush.bf16.msra.mxu0 %v1025
    %1414 = vmatpush.bf16.msra.mxu0 %v1024
    %1415 = vmatmul.bf16.gmra.mxu0 %v1405
    %v1416 = vpop.f32.mrf.mxu0
    %v1417 = vadd.f32 %v1006, %v1416
    %v1418 = vpop.f32.mrf.mxu0
    %1419 = vdwg.mxu0
    %v1420 = vxor.u32 %v1417, 2147483648
    %v1421 = vmul.f32 %v1420, 1.442695
    %v1422 = vpow.pop %v1421
    %v1423 = vadd.f32 %v1422, 1.0
    %v1424 = vrcp.pop %v1423
    %v1425 = vmul.f32 %v1423, %v1424
    %v1426 = vsub.f32 1.0, %v1425
    %v1427 = vmul.f32 %v1424, %v1426
    %v1428 = vadd.f32 %v1424, %v1427
    %vm1429 = vweird.f32 %v1423
    %vm1430 = vweird.f32 %v1424
    %vm1431 = vmor %vm1429, %vm1430
    %v1432 = vsel %vm1431, %v1424, %v1428
    %v1433 = vand.u32 2147483647, %v1423
    %vm1434 = vcmp.eq.f32.partialorder %v1433, 8.507059e+37
    %v1435 = vand.u32 %v1423, 2147483648
    %v1436 = vor.u32 1.1754944e-38, %v1435
    %v1437 = vsel %vm1434, %v1436, %v1432
    %v1438 = vmul.f32 1.0, %v1437
    %v1439 = vtanh.pop %v1417
    %v1440 = vmul.f32 %v1438, %v1266
    %1442 = vrot.lane.b32.xlu0 %v1439, 32
    %v1443 = vpop.permute.xlu0 %1442
    %v1445 = vmul.f32 %v1438, %v1443
    %1447 = vrot.lane.b32.xlu0 %v1445, 32
    %v1448 = vpop.permute.xlu0 %1447
    %v1450 = vadd.f32 %v1440, %v1448
    %v1451 = vtanh.pop %v1450
    %1453 = vrot.lane.b32.xlu0 %v1451, 32
    %v1454 = vpop.permute.xlu0 %1453
    %v1456 = vmul.f32 %v1438, %v1454
    %v1457 = vpack.c.bf16 %v1385, %v1385
    %v1458 = vpack.c.bf16 %v1386, %v1386
    %v1461 = vunpack.c.l.b16 %v1457
    %v1462 = vunpack.c.l.b16 %v1458
    %v1463 = vrot.slane %v1461, 2
    %v1464 = vrot.slane %v1462, 1
    %v1465 = vsel %vm421, %v1464, %v1463
    %v1466 = vpack.c.b16 %v1465, %v1465
    %1467 = vrot.lane.b32.xlu0 %v1466, 64
    %v1468 = vpop.permute.xlu0 %1467
    %v1470 = vsel %vm898, %v1468, 0
    %1472 = vmatpush.bf16.msra.mxu0 0
    %1473 = vmatpush.bf16.msra.mxu0 0
    %1474 = vmatpush.bf16.msra.mxu0 0
    %1475 = vmatpush.bf16.msra.mxu0 0
    %1476 = vmatpush.bf16.msra.mxu0 0
    %1477 = vmatpush.bf16.msra.mxu0 0
    %1478 = vmatpush.bf16.msra.mxu0 %v895
    %1479 = vmatpush.bf16.msra.mxu0 %v894
    %1480 = vmatmul.bf16.gmra.mxu0 %v1470
    %v1481 = vpop.f32.mrf.mxu0
    %v1482 = vadd.f32 0.0, %v1481
    %v1483 = vpop.f32.mrf.mxu0
    %1484 = vdwg.mxu0
    %v1486 = vrot.slane %v1482, 5
    %v1487 = vrot.slane %v1482, 6
    %v1490 = vadd.f32 %v867, %v1486
    %v1491 = vadd.f32 %v871, %v1487
    %v1492 = vxor.u32 %v1490, 2147483648
    %v1493 = vxor.u32 %v1491, 2147483648
    %v1494 = vmul.f32 %v1492, 1.442695
    %v1495 = vpow.pop %v1494
    %v1496 = vmul.f32 %v1493, 1.442695
    %v1497 = vpow.pop %v1496
    %v1498 = vadd.f32 %v1495, 1.0
    %v1499 = vadd.f32 %v1497, 1.0
    %v1500 = vrcp.pop %v1498
    %v1501 = vmul.f32 %v1498, %v1500
    %v1502 = vsub.f32 1.0, %v1501
    %v1503 = vmul.f32 %v1500, %v1502
    %v1504 = vadd.f32 %v1500, %v1503
    %vm1505 = vweird.f32 %v1498
    %vm1506 = vweird.f32 %v1500
    %vm1507 = vmor %vm1505, %vm1506
    %v1508 = vsel %vm1507, %v1500, %v1504
    %v1509 = vand.u32 2147483647, %v1498
    %vm1510 = vcmp.eq.f32.partialorder %v1509, 8.507059e+37
    %v1511 = vand.u32 %v1498, 2147483648
    %v1512 = vor.u32 1.1754944e-38, %v1511
    %v1513 = vsel %vm1510, %v1512, %v1508
    %v1514 = vmul.f32 1.0, %v1513
    %v1515 = vrcp.pop %v1499
    %v1516 = vmul.f32 %v1499, %v1515
    %v1517 = vsub.f32 1.0, %v1516
    %v1518 = vmul.f32 %v1515, %v1517
    %v1519 = vadd.f32 %v1515, %v1518
    %vm1520 = vweird.f32 %v1499
    %vm1521 = vweird.f32 %v1515
    %vm1522 = vmor %vm1520, %vm1521
    %v1523 = vsel %vm1522, %v1515, %v1519
    %v1524 = vand.u32 2147483647, %v1499
    %vm1525 = vcmp.eq.f32.partialorder %v1524, 8.507059e+37
    %v1526 = vand.u32 %v1499, 2147483648
    %v1527 = vor.u32 1.1754944e-38, %v1526
    %v1528 = vsel %vm1525, %v1527, %v1523
    %v1529 = vmul.f32 1.0, %v1528
    %v1530 = vtanh.pop %v1490
    %v1531 = vtanh.pop %v1491
    %v1534 = vrot.slane %v1373, 7
    %v1535 = vrot.slane %v1374, 7
    %v1538 = vmul.f32 %v1514, %v1534
    %v1539 = vmul.f32 %v1529, %v1535
    %1542 = vrot.lane.b32.xlu0 %v1530, 32
    %v1543 = vpop.permute.xlu0 %1542
    %1544 = vrot.lane.b32.xlu0 %v1531, 32
    %v1545 = vpop.permute.xlu0 %1544
    %v1548 = vmul.f32 %v1514, %v1543
    %v1549 = vmul.f32 %v1529, %v1545
    %1552 = vrot.lane.b32.xlu0 %v1548, 32
    %v1553 = vpop.permute.xlu0 %1552
    %1554 = vrot.lane.b32.xlu0 %v1549, 32
    %v1555 = vpop.permute.xlu0 %1554
    %v1558 = vadd.f32 %v1538, %v1553
    %v1559 = vadd.f32 %v1539, %v1555
    %v1560 = vtanh.pop %v1558
    %v1561 = vtanh.pop %v1559
    %1564 = vrot.lane.b32.xlu0 %v1560, 32
    %v1565 = vpop.permute.xlu0 %1564
    %1566 = vrot.lane.b32.xlu0 %v1561, 32
    %v1567 = vpop.permute.xlu0 %1566
    %v1570 = vmul.f32 %v1514, %v1565
    %v1571 = vmul.f32 %v1529, %v1567
    %v1574 = vperm.slane %v1570, 3
    %v1575 = vperm.slane %v1571, 3
    %v1576 = vsel %vm427, %v1575, %v1574
    %1577 = vrot.lane.b32.xlu0 %v1576, 64
    %v1578 = vpop.permute.xlu0 %1577
    %v1581 = vrot.slane %v1456, 5
    %1582 = vrot.lane.b32.xlu0 %v1581, 96
    %v1583 = vpop.permute.xlu0 %1582
    %v1585 = vsel %vm898, %v1578, %v1583
    %v1586 = vpack.c.bf16 %v1585, %v1585
    %v1588 = vshrl.u32 %v1586, 16
    %v1590 = vrot.slane %v1588, 1
    %v1591 = vshll.u32 %v1586, 16
    %v1593 = vrot.slane %v1591, 2
    %v1594 = vor.u32 %v1590, %v1593
    %v1596 = vsel %vm583, %v1594, 0
    %1598 = vmatpush.bf16.msra.mxu0 0
    %1599 = vmatpush.bf16.msra.mxu0 0
    %1600 = vmatpush.bf16.msra.mxu0 0
    %1601 = vmatpush.bf16.msra.mxu0 0
    %1602 = vmatpush.bf16.msra.mxu0 %v1027
    %1603 = vmatpush.bf16.msra.mxu0 %v1026
    %1604 = vmatpush.bf16.msra.mxu0 %v1025
    %1605 = vmatpush.bf16.msra.mxu0 %v1024
    %1606 = vmatmul.bf16.gmra.mxu0 %v1596
    %v1607 = vpop.f32.mrf.mxu0
    %v1608 = vadd.f32 %v1006, %v1607
    %v1609 = vpop.f32.mrf.mxu0
    %1610 = vdwg.mxu0
    %v1611 = vxor.u32 %v1608, 2147483648
    %v1612 = vmul.f32 %v1611, 1.442695
    %v1613 = vpow.pop %v1612
    %v1614 = vadd.f32 %v1613, 1.0
    %v1615 = vrcp.pop %v1614
    %v1616 = vmul.f32 %v1614, %v1615
    %v1617 = vsub.f32 1.0, %v1616
    %v1618 = vmul.f32 %v1615, %v1617
    %v1619 = vadd.f32 %v1615, %v1618
    %vm1620 = vweird.f32 %v1614
    %vm1621 = vweird.f32 %v1615
    %vm1622 = vmor %vm1620, %vm1621
    %v1623 = vsel %vm1622, %v1615, %v1619
    %v1624 = vand.u32 2147483647, %v1614
    %vm1625 = vcmp.eq.f32.partialorder %v1624, 8.507059e+37
    %v1626 = vand.u32 %v1614, 2147483648
    %v1627 = vor.u32 1.1754944e-38, %v1626
    %v1628 = vsel %vm1625, %v1627, %v1623
    %v1629 = vmul.f32 1.0, %v1628
    %v1630 = vtanh.pop %v1608
    %v1631 = vmul.f32 %v1629, %v1450
    %1633 = vrot.lane.b32.xlu0 %v1630, 32
    %v1634 = vpop.permute.xlu0 %1633
    %v1636 = vmul.f32 %v1629, %v1634
    %1638 = vrot.lane.b32.xlu0 %v1636, 32
    %v1639 = vpop.permute.xlu0 %1638
    %v1641 = vadd.f32 %v1631, %v1639
    %v1642 = vtanh.pop %v1641
    %1644 = vrot.lane.b32.xlu0 %v1642, 32
    %v1645 = vpop.permute.xlu0 %1644
    %v1647 = vmul.f32 %v1629, %v1645
    %v1648 = vpack.c.bf16 %v1647, %v1647
    %v1649 = vld [vmem:[#allocation8] sm:$0xf]
    %v1650 = vld [vmem:[#allocation8 + $0x4] sm:$0xf]
    %v1651 = vld [vmem:[#allocation8 + $0x8] sm:$0xf]
    %v1652 = vld [vmem:[#allocation8 + $0xc] sm:$0xf]
    %v1653 = vld [vmem:[%s11] sm:$0x1]
    %v1655 = vperm.slane %v1653, 0
    %1658 = vrot.lane.b32.xlu0 %v1648, 64
    %v1659 = vpop.permute.xlu0 %1658
    %v1664 = vunpack.c.l.b16 %v1649
    %v1665 = vunpack.c.l.b16 %v1650
    %v1666 = vunpack.c.l.b16 %v1651
    %v1667 = vunpack.c.l.b16 %v1652
    %v1668 = vpack.c.b16 %v1665, %v1664
    %v1669 = vpack.c.b16 %v1667, %v1666
    %v1673 = vsel %vm898, %v1659, 0
    %1675 = vmatpush.bf16.msra.mxu0 0
    %1676 = vmatpush.bf16.msra.mxu0 0
    %1677 = vmatpush.bf16.msra.mxu0 0
    %1678 = vmatpush.bf16.msra.mxu0 0
    %1679 = vmatpush.bf16.msra.mxu0 0
    %1680 = vmatpush.bf16.msra.mxu0 0
    %1681 = vmatpush.bf16.msra.mxu0 %v1669
    %1682 = vmatpush.bf16.msra.mxu0 %v1668
    %1683 = vmatmul.bf16.gmra.mxu0 %v1673
    %v1684 = vpop.f32.mrf.mxu0
    %v1685 = vadd.f32 %v1655, %v1684
    %v1686 = vpop.f32.mrf.mxu0
    %1687 = vdwg.mxu0
    %1688 = vst [vmem:[#allocation10] sm:$0x3] %v1685
    // Predicated region
    $region66: #{cnn_lstm_forward.1} parent=1 // pred_check
      _
    $region67: #{cnn_lstm_forward.1} parent=1 // pred_check_branch
      %1690 = sbr.rel (0) target = $region69
    $region68: #{cnn_lstm_forward.1} parent=1 // pred_region
      %1692 = vsyncadd [#allocation4], 0
      %s1694 = sshll.u32 [#allocation10], 4
      %s1695 = int_to_ptr.vmem [resolvable:$true] %s1694
      %s1696 = sshll.u32 %s12, 4
      %s1697 = int_to_ptr.hbm [resolvable:$true] %s1696
      %1699 = dma.vmem_to_hbm [thread:$0]  %s1695, 32, %s1697, [#allocation4]
    $region69: #{cnn_lstm_forward.1} parent=1 // pred_fallthru
      _
    // Predicated region
    $region70: #{cnn_lstm_forward.1} parent=1 // pred_check
      _
    $region71: #{cnn_lstm_forward.1} parent=1 // pred_check_branch
      %1701 = sbr.rel (0) target = $region73
    $region72: #{cnn_lstm_forward.1} parent=1 // pred_region
      %1703 = dma.done [#allocation4], 32
    $region73: #{cnn_lstm_forward.1} parent=1 // pred_fallthru
      _
    %1704 = vsyncpa [#allocation3], 1
    %1705 = vsyncpa [#allocation6], 1
    %1706 = vsyncpa [#allocation9], 1
    %1707 = vsyncpa [#allocation4], 1

</llo_original>
